<compile_context>
chip_gen: v7x
topology: tpu7x:2x2x1
jax: 0.10.0
libtpu: 0.0.40
codegen_flags: <defaults>
</compile_context>

<pallas_src>
import functools

import jax
import jax.numpy as jnp
from jax.experimental import pallas as pl
from jax.experimental.pallas import tpu as pltpu

EMBED_DIM = 128
NOISE_DIM = 64
HIDDEN = 512
LN_EPS = 1e-5


def _round_up(x, m):
    return ((x + m - 1) // m) * m


def _layernorm(h, gamma, beta):
    # Single-pass stats: E[h] and E[h^2] together (one reduce pair per row).
    mu = jnp.mean(h, axis=-1, keepdims=True)
    ms = jnp.mean(h * h, axis=-1, keepdims=True)
    var = jnp.maximum(ms - mu * mu, 0.0)
    return (h - mu) * jax.lax.rsqrt(var + LN_EPS) * gamma + beta


def _leaky_relu(h, slope=0.2):
    return jnp.where(h > 0, h, slope * h)


def generator_kernel(
    h_ref, r_ref, n_ref,                     # [TB,E] bf16, [TB,E] bf16, [TB,Nz] bf16
    w1h_ref, w1r_ref, w1n_ref,               # bf16 layer-1 weight chunks
    b1_ref, g1_ref, be1_ref,                 # f32 [1,512]
    w2_ref, b2_ref, g2_ref, be2_ref,         # bf16 [512,512] + f32 [1,512] x3
    w3_ref,                                  # bf16 [512,E]
    wrh_ref, wrr_ref, wrn_ref,               # bf16 residual chunks (x0.02 pre-folded)
    bo_ref,                                  # f32 [1,E]  (= b3 + 0.02*br)
    out_ref,                                 # [TB,E] f32
):
    he = h_ref[...]
    re = r_ref[...]
    nz = n_ref[...]

    # --- layer 1: split-K matmul (concat never materialized), f32 accumulate ---
    h = (jnp.dot(he, w1h_ref[...], preferred_element_type=jnp.float32)
         + jnp.dot(re, w1r_ref[...], preferred_element_type=jnp.float32)
         + jnp.dot(nz, w1n_ref[...], preferred_element_type=jnp.float32)
         + b1_ref[...])
    h = _leaky_relu(_layernorm(h, g1_ref[...], be1_ref[...]))
    # Dropout(0.1): eval-mode identity.

    # --- layer 2 ---
    h = jnp.dot(h.astype(jnp.bfloat16), w2_ref[...],
                preferred_element_type=jnp.float32) + b2_ref[...]
    h = _leaky_relu(_layernorm(h, g2_ref[...], be2_ref[...]))

    # --- output projection + scaled residual (scale folded into wr*/bo) ---
    out = jnp.dot(h.astype(jnp.bfloat16), w3_ref[...],
                  preferred_element_type=jnp.float32)
    out = out + jnp.dot(he, wrh_ref[...], preferred_element_type=jnp.float32)
    out = out + jnp.dot(re, wrr_ref[...], preferred_element_type=jnp.float32)
    out = out + jnp.dot(nz, wrn_ref[...], preferred_element_type=jnp.float32)
    out_ref[...] = out + bo_ref[...]


def init_params(key, embed_dim=EMBED_DIM, noise_dim=NOISE_DIM, hidden=HIDDEN):
    """Mirrors the module init: xavier_uniform(gain=0.01) weights, zero biases,
    LayerNorm gamma=1 / beta=0. Weights stored as [in, out] (kernel does x @ W)."""
    input_dim = embed_dim * 2 + noise_dim

    def xavier(k, fan_in, fan_out, gain=0.01):
        bound = gain * jnp.sqrt(6.0 / (fan_in + fan_out))
        return jax.random.uniform(k, (fan_in, fan_out), jnp.float32, -bound, bound)

    k1, k2, k3, kr = jax.random.split(key, 4)
    return dict(
        w1=xavier(k1, input_dim, hidden),
        b1=jnp.zeros((1, hidden), jnp.float32),
        g1=jnp.ones((1, hidden), jnp.float32),
        be1=jnp.zeros((1, hidden), jnp.float32),
        w2=xavier(k2, hidden, hidden),
        b2=jnp.zeros((1, hidden), jnp.float32),
        g2=jnp.ones((1, hidden), jnp.float32),
        be2=jnp.zeros((1, hidden), jnp.float32),
        w3=xavier(k3, hidden, embed_dim),
        b3=jnp.zeros((1, embed_dim), jnp.float32),
        wr=xavier(kr, input_dim, embed_dim),
        br=jnp.zeros((1, embed_dim), jnp.float32),
    )


def prepare_params(params, embed_dim=EMBED_DIM, noise_dim=NOISE_DIM):
    """One-time constant transform: split concat-weights into per-input K-chunks,
    fold the 0.02 residual scale into weights/bias, cast matmul weights to bf16."""
    E, Nz = embed_dim, noise_dim
    w1, wr = params["w1"], params["wr"]
    bf = lambda a: a.astype(jnp.bfloat16)
    return dict(
        w1h=bf(w1[:E]), w1r=bf(w1[E:2 * E]), w1n=bf(w1[2 * E:2 * E + Nz]),
        b1=params["b1"], g1=params["g1"], be1=params["be1"],
        w2=bf(params["w2"]), b2=params["b2"], g2=params["g2"], be2=params["be2"],
        w3=bf(params["w3"]),
        wrh=bf(wr[:E] * 0.02), wrr=bf(wr[E:2 * E] * 0.02),
        wrn=bf(wr[2 * E:2 * E + Nz] * 0.02),
        bo=params["b3"] + 0.02 * params["br"],
    )


@functools.partial(jax.jit, static_argnames=("embed_dim", "noise_dim", "tile_b"))
def generator_forward(prepared, h_emb, r_emb, noise,
                      embed_dim=EMBED_DIM, noise_dim=NOISE_DIM, tile_b=256):
    B = h_emb.shape[0]
    hidden = HIDDEN
    in_dim = 2 * embed_dim + noise_dim

    # Batch tile: large (<=256) for MXU occupancy, clamped for small batches;
    # pad B so every block is full (no masked partial stores).
    tb = min(tile_b, _round_up(B, 8))
    b_pad = _round_up(B, tb)

    def prep(a):
        a = a.astype(jnp.bfloat16)
        if b_pad != B:
            a = jnp.pad(a, ((0, b_pad - B), (0, 0)))
        return a

    he, re, nz = prep(h_emb), prep(r_emb), prep(noise)

    order = ("w1h", "w1r", "w1n", "b1", "g1", "be1",
             "w2", "b2", "g2", "be2",
             "w3", "wrh", "wrr", "wrn", "bo")
    weights = tuple(prepared[k] for k in order)
    # Weights / LN params stay resident across the batch grid.
    w_specs = [pl.BlockSpec(w.shape, lambda i: (0, 0)) for w in weights]

    act_e_spec = pl.BlockSpec((tb, embed_dim), lambda i: (i, 0))
    act_n_spec = pl.BlockSpec((tb, noise_dim), lambda i: (i, 0))
    out_spec = pl.BlockSpec((tb, embed_dim), lambda i: (i, 0))

    mm_flops = 2 * b_pad * (in_dim * hidden + hidden * hidden
                            + hidden * embed_dim + in_dim * embed_dim)
    w_bytes = 2 * (in_dim * hidden + hidden * hidden
                   + hidden * embed_dim + in_dim * embed_dim)
    act_bytes = b_pad * in_dim * 2 + b_pad * embed_dim * 4
    misc_bytes = 4 * (6 * hidden + embed_dim)
    cost = pl.CostEstimate(flops=int(mm_flops),
                           transcendentals=int(2 * b_pad),
                           bytes_accessed=int(w_bytes + act_bytes + misc_bytes))

    out = pl.pallas_call(
        generator_kernel,
        out_shape=jax.ShapeDtypeStruct((b_pad, embed_dim), jnp.float32),
        grid=(b_pad // tb,),
        in_specs=[act_e_spec, act_e_spec, act_n_spec] + w_specs,
        out_specs=out_spec,
        compiler_params=pltpu.CompilerParams(dimension_semantics=("parallel",)),
        cost_estimate=cost,
    )(he, re, nz, *weights)
    return out[:B]


def generator_forward_ref(params, h_emb, r_emb, noise):
    """Pure-JAX reference mirroring the kernel's precision pattern
    (bf16 matmul operands, f32 accumulation, f32 elementwise/LN)."""
    x = jnp.concatenate([h_emb, r_emb, noise], axis=-1).astype(jnp.float32)

    def mm(a, w):
        return jnp.dot(a.astype(jnp.bfloat16), w.astype(jnp.bfloat16),
                       preferred_element_type=jnp.float32)

    h = mm(x, params["w1"]) + params["b1"]
    h = _leaky_relu(_layernorm(h, params["g1"], params["be1"]))
    h = mm(h, params["w2"]) + params["b2"]
    h = _leaky_relu(_layernorm(h, params["g2"], params["be2"]))
    refined = mm(h, params["w3"]) + params["b3"]
    residual = mm(x, params["wr"]) + params["br"]
    return refined + residual * 0.02


if __name__ == "__main__":
    key = jax.random.PRNGKey(0)
    k_params, k_h, k_r, k_n = jax.random.split(key, 4)

    B = 8  # small demo batch (multiple of 8 sublanes)
    raw_params = init_params(k_params)
    prepared = prepare_params(raw_params)

    h_emb = jax.random.normal(k_h, (B, EMBED_DIM), jnp.float32)
    r_emb = jax.random.normal(k_r, (B, EMBED_DIM), jnp.float32)
    noise = jax.random.normal(k_n, (B, NOISE_DIM), jnp.float32) * 0.1  # default-path noise

    out = jax.block_until_ready(generator_forward(prepared, h_emb, r_emb, noise))
    ref = generator_forward_ref(raw_params, h_emb, r_emb, noise)

    assert out.shape == (B, EMBED_DIM), out.shape
    max_err = float(jnp.max(jnp.abs(out - ref)))
    assert jnp.allclose(out, ref, atol=2e-3, rtol=2e-2), max_err

    print("KERNEL_OK")
</pallas_src>

<mosaic_0001>
module attributes {stable_mosaic.version = 11 : i64} {
  func.func @generator_kernel(%arg0: i32, %arg1: memref<8x128xbf16, #tpu.memory_space<vmem>>, %arg2: memref<8x128xbf16, #tpu.memory_space<vmem>>, %arg3: memref<8x64xbf16, #tpu.memory_space<vmem>>, %arg4: memref<128x512xbf16, #tpu.memory_space<vmem>>, %arg5: memref<128x512xbf16, #tpu.memory_space<vmem>>, %arg6: memref<64x512xbf16, #tpu.memory_space<vmem>>, %arg7: memref<1x512xf32, #tpu.memory_space<vmem>>, %arg8: memref<1x512xf32, #tpu.memory_space<vmem>>, %arg9: memref<1x512xf32, #tpu.memory_space<vmem>>, %arg10: memref<512x512xbf16, #tpu.memory_space<vmem>>, %arg11: memref<1x512xf32, #tpu.memory_space<vmem>>, %arg12: memref<1x512xf32, #tpu.memory_space<vmem>>, %arg13: memref<1x512xf32, #tpu.memory_space<vmem>>, %arg14: memref<512x128xbf16, #tpu.memory_space<vmem>>, %arg15: memref<128x128xbf16, #tpu.memory_space<vmem>>, %arg16: memref<128x128xbf16, #tpu.memory_space<vmem>>, %arg17: memref<64x128xbf16, #tpu.memory_space<vmem>>, %arg18: memref<1x128xf32, #tpu.memory_space<vmem>>, %arg19: memref<8x128xf32, #tpu.memory_space<vmem>>) attributes {dimension_semantics = [#tpu.dimension_semantics<parallel>], iteration_bounds = array<i64: 1>, scalar_prefetch = 0 : i64, scratch_operands = 0 : i64, tpu.core_type = #tpu.core_type<tc>, window_params = [{transform_indices = @transform_0, window_bounds = array<i64: 8, 128>}, {transform_indices = @transform_1, window_bounds = array<i64: 8, 128>}, {transform_indices = @transform_2, window_bounds = array<i64: 8, 64>}, {pipeline_mode = #tpu.pipeline_mode<synchronous>, transform_indices = @transform_3, window_bounds = array<i64: 128, 512>}, {pipeline_mode = #tpu.pipeline_mode<synchronous>, transform_indices = @transform_4, window_bounds = array<i64: 128, 512>}, {pipeline_mode = #tpu.pipeline_mode<synchronous>, transform_indices = @transform_5, window_bounds = array<i64: 64, 512>}, {pipeline_mode = #tpu.pipeline_mode<synchronous>, transform_indices = @transform_6, window_bounds = array<i64: 1, 512>}, {pipeline_mode = #tpu.pipeline_mode<synchronous>, transform_indices = @transform_7, window_bounds = array<i64: 1, 512>}, {pipeline_mode = #tpu.pipeline_mode<synchronous>, transform_indices = @transform_8, window_bounds = array<i64: 1, 512>}, {pipeline_mode = #tpu.pipeline_mode<synchronous>, transform_indices = @transform_9, window_bounds = array<i64: 512, 512>}, {pipeline_mode = #tpu.pipeline_mode<synchronous>, transform_indices = @transform_10, window_bounds = array<i64: 1, 512>}, {pipeline_mode = #tpu.pipeline_mode<synchronous>, transform_indices = @transform_11, window_bounds = array<i64: 1, 512>}, {pipeline_mode = #tpu.pipeline_mode<synchronous>, transform_indices = @transform_12, window_bounds = array<i64: 1, 512>}, {pipeline_mode = #tpu.pipeline_mode<synchronous>, transform_indices = @transform_13, window_bounds = array<i64: 512, 128>}, {pipeline_mode = #tpu.pipeline_mode<synchronous>, transform_indices = @transform_14, window_bounds = array<i64: 128, 128>}, {pipeline_mode = #tpu.pipeline_mode<synchronous>, transform_indices = @transform_15, window_bounds = array<i64: 128, 128>}, {pipeline_mode = #tpu.pipeline_mode<synchronous>, transform_indices = @transform_16, window_bounds = array<i64: 64, 128>}, {pipeline_mode = #tpu.pipeline_mode<synchronous>, transform_indices = @transform_17, window_bounds = array<i64: 1, 128>}, {transform_indices = @transform_18, window_bounds = array<i64: 8, 128>}]} {
    %c0 = arith.constant 0 : index
    %c0_0 = arith.constant 0 : index
    %0 = vector.load %arg1[%c0, %c0_0] : memref<8x128xbf16, #tpu.memory_space<vmem>>, vector<8x128xbf16>
    %c0_1 = arith.constant 0 : index
    %c0_2 = arith.constant 0 : index
    %1 = vector.load %arg2[%c0_1, %c0_2] : memref<8x128xbf16, #tpu.memory_space<vmem>>, vector<8x128xbf16>
    %c0_3 = arith.constant 0 : index
    %c0_4 = arith.constant 0 : index
    %2 = vector.load %arg3[%c0_3, %c0_4] : memref<8x64xbf16, #tpu.memory_space<vmem>>, vector<8x64xbf16>
    %c0_5 = arith.constant 0 : index
    %c0_6 = arith.constant 0 : index
    %3 = vector.load %arg4[%c0_5, %c0_6] : memref<128x512xbf16, #tpu.memory_space<vmem>>, vector<128x512xbf16>
    %cst = arith.constant dense<0.000000e+00> : vector<8x512xf32>
    %4 = tpu.matmul %0, %3, %cst {dimension_numbers = #tpu.dot_dimension_numbers<[1], [0], [0], [1], [0, 0, 1, 1], [], []>} : vector<8x128xbf16>, vector<128x512xbf16>, vector<8x512xf32> -> vector<8x512xf32>
    %c0_7 = arith.constant 0 : index
    %c0_8 = arith.constant 0 : index
    %5 = vector.load %arg5[%c0_7, %c0_8] : memref<128x512xbf16, #tpu.memory_space<vmem>>, vector<128x512xbf16>
    %cst_9 = arith.constant dense<0.000000e+00> : vector<8x512xf32>
    %6 = tpu.matmul %1, %5, %cst_9 {dimension_numbers = #tpu.dot_dimension_numbers<[1], [0], [0], [1], [0, 0, 1, 1], [], []>} : vector<8x128xbf16>, vector<128x512xbf16>, vector<8x512xf32> -> vector<8x512xf32>
    %7 = arith.addf %4, %6 : vector<8x512xf32>
    %c0_10 = arith.constant 0 : index
    %c0_11 = arith.constant 0 : index
    %8 = vector.load %arg6[%c0_10, %c0_11] : memref<64x512xbf16, #tpu.memory_space<vmem>>, vector<64x512xbf16>
    %cst_12 = arith.constant dense<0.000000e+00> : vector<8x512xf32>
    %9 = tpu.matmul %2, %8, %cst_12 {dimension_numbers = #tpu.dot_dimension_numbers<[1], [0], [0], [1], [0, 0, 1, 1], [], []>} : vector<8x64xbf16>, vector<64x512xbf16>, vector<8x512xf32> -> vector<8x512xf32>
    %10 = arith.addf %7, %9 : vector<8x512xf32>
    %c0_13 = arith.constant 0 : index
    %c0_14 = arith.constant 0 : index
    %11 = vector.load %arg7[%c0_13, %c0_14] : memref<1x512xf32, #tpu.memory_space<vmem>>, vector<1x512xf32>
    %12 = vector.broadcast %11 : vector<1x512xf32> to vector<8x512xf32>
    %13 = arith.addf %10, %12 : vector<8x512xf32>
    %c0_15 = arith.constant 0 : index
    %c0_16 = arith.constant 0 : index
    %14 = vector.load %arg8[%c0_15, %c0_16] : memref<1x512xf32, #tpu.memory_space<vmem>>, vector<1x512xf32>
    %c0_17 = arith.constant 0 : index
    %c0_18 = arith.constant 0 : index
    %15 = vector.load %arg9[%c0_17, %c0_18] : memref<1x512xf32, #tpu.memory_space<vmem>>, vector<1x512xf32>
    %cst_19 = arith.constant dense<0.000000e+00> : vector<8xf32>
    %16 = vector.multi_reduction <add>, %13, %cst_19 [1] : vector<8x512xf32> to vector<8xf32>
    %17 = vector.shape_cast %16 : vector<8xf32> to vector<8x1xf32>
    %cst_20 = arith.constant 5.120000e+02 : f32
    %18 = vector.broadcast %cst_20 : f32 to vector<8x1xf32>
    %19 = arith.divf %17, %18 : vector<8x1xf32>
    %20 = arith.mulf %13, %13 : vector<8x512xf32>
    %cst_21 = arith.constant dense<0.000000e+00> : vector<8xf32>
    %21 = vector.multi_reduction <add>, %20, %cst_21 [1] : vector<8x512xf32> to vector<8xf32>
    %22 = vector.shape_cast %21 : vector<8xf32> to vector<8x1xf32>
    %cst_22 = arith.constant 5.120000e+02 : f32
    %23 = vector.broadcast %cst_22 : f32 to vector<8x1xf32>
    %24 = arith.divf %22, %23 : vector<8x1xf32>
    %25 = arith.mulf %19, %19 : vector<8x1xf32>
    %26 = arith.subf %24, %25 : vector<8x1xf32>
    %cst_23 = arith.constant 0.000000e+00 : f32
    %27 = vector.broadcast %cst_23 : f32 to vector<8x1xf32>
    %28 = arith.maximumf %26, %27 : vector<8x1xf32>
    %29 = vector.broadcast %19 : vector<8x1xf32> to vector<8x512xf32>
    %30 = arith.subf %13, %29 : vector<8x512xf32>
    %cst_24 = arith.constant 9.99999974E-6 : f32
    %31 = vector.broadcast %cst_24 : f32 to vector<8x1xf32>
    %32 = arith.addf %28, %31 : vector<8x1xf32>
    %33 = math.rsqrt %32 : vector<8x1xf32>
    %34 = vector.broadcast %33 : vector<8x1xf32> to vector<8x512xf32>
    %35 = arith.mulf %30, %34 : vector<8x512xf32>
    %36 = vector.broadcast %14 : vector<1x512xf32> to vector<8x512xf32>
    %37 = arith.mulf %35, %36 : vector<8x512xf32>
    %38 = vector.broadcast %15 : vector<1x512xf32> to vector<8x512xf32>
    %39 = arith.addf %37, %38 : vector<8x512xf32>
    %cst_25 = arith.constant 0.000000e+00 : f32
    %40 = vector.broadcast %cst_25 : f32 to vector<8x512xf32>
    %41 = arith.cmpf ogt, %39, %40 : vector<8x512xf32>
    %cst_26 = arith.constant 2.000000e-01 : f32
    %42 = vector.broadcast %cst_26 : f32 to vector<8x512xf32>
    %43 = arith.mulf %42, %39 : vector<8x512xf32>
    %44 = arith.select %41, %39, %43 : vector<8x512xi1>, vector<8x512xf32>
    %45 = arith.truncf %44 : vector<8x512xf32> to vector<8x512xbf16>
    %c0_27 = arith.constant 0 : index
    %c0_28 = arith.constant 0 : index
    %46 = vector.load %arg10[%c0_27, %c0_28] : memref<512x512xbf16, #tpu.memory_space<vmem>>, vector<512x512xbf16>
    %cst_29 = arith.constant dense<0.000000e+00> : vector<8x512xf32>
    %47 = tpu.matmul %45, %46, %cst_29 {dimension_numbers = #tpu.dot_dimension_numbers<[1], [0], [0], [1], [0, 0, 1, 1], [], []>} : vector<8x512xbf16>, vector<512x512xbf16>, vector<8x512xf32> -> vector<8x512xf32>
    %c0_30 = arith.constant 0 : index
    %c0_31 = arith.constant 0 : index
    %48 = vector.load %arg11[%c0_30, %c0_31] : memref<1x512xf32, #tpu.memory_space<vmem>>, vector<1x512xf32>
    %49 = vector.broadcast %48 : vector<1x512xf32> to vector<8x512xf32>
    %50 = arith.addf %47, %49 : vector<8x512xf32>
    %c0_32 = arith.constant 0 : index
    %c0_33 = arith.constant 0 : index
    %51 = vector.load %arg12[%c0_32, %c0_33] : memref<1x512xf32, #tpu.memory_space<vmem>>, vector<1x512xf32>
    %c0_34 = arith.constant 0 : index
    %c0_35 = arith.constant 0 : index
    %52 = vector.load %arg13[%c0_34, %c0_35] : memref<1x512xf32, #tpu.memory_space<vmem>>, vector<1x512xf32>
    %cst_36 = arith.constant dense<0.000000e+00> : vector<8xf32>
    %53 = vector.multi_reduction <add>, %50, %cst_36 [1] : vector<8x512xf32> to vector<8xf32>
    %54 = vector.shape_cast %53 : vector<8xf32> to vector<8x1xf32>
    %cst_37 = arith.constant 5.120000e+02 : f32
    %55 = vector.broadcast %cst_37 : f32 to vector<8x1xf32>
    %56 = arith.divf %54, %55 : vector<8x1xf32>
    %57 = arith.mulf %50, %50 : vector<8x512xf32>
    %cst_38 = arith.constant dense<0.000000e+00> : vector<8xf32>
    %58 = vector.multi_reduction <add>, %57, %cst_38 [1] : vector<8x512xf32> to vector<8xf32>
    %59 = vector.shape_cast %58 : vector<8xf32> to vector<8x1xf32>
    %cst_39 = arith.constant 5.120000e+02 : f32
    %60 = vector.broadcast %cst_39 : f32 to vector<8x1xf32>
    %61 = arith.divf %59, %60 : vector<8x1xf32>
    %62 = arith.mulf %56, %56 : vector<8x1xf32>
    %63 = arith.subf %61, %62 : vector<8x1xf32>
    %cst_40 = arith.constant 0.000000e+00 : f32
    %64 = vector.broadcast %cst_40 : f32 to vector<8x1xf32>
    %65 = arith.maximumf %63, %64 : vector<8x1xf32>
    %66 = vector.broadcast %56 : vector<8x1xf32> to vector<8x512xf32>
    %67 = arith.subf %50, %66 : vector<8x512xf32>
    %cst_41 = arith.constant 9.99999974E-6 : f32
    %68 = vector.broadcast %cst_41 : f32 to vector<8x1xf32>
    %69 = arith.addf %65, %68 : vector<8x1xf32>
    %70 = math.rsqrt %69 : vector<8x1xf32>
    %71 = vector.broadcast %70 : vector<8x1xf32> to vector<8x512xf32>
    %72 = arith.mulf %67, %71 : vector<8x512xf32>
    %73 = vector.broadcast %51 : vector<1x512xf32> to vector<8x512xf32>
    %74 = arith.mulf %72, %73 : vector<8x512xf32>
    %75 = vector.broadcast %52 : vector<1x512xf32> to vector<8x512xf32>
    %76 = arith.addf %74, %75 : vector<8x512xf32>
    %cst_42 = arith.constant 0.000000e+00 : f32
    %77 = vector.broadcast %cst_42 : f32 to vector<8x512xf32>
    %78 = arith.cmpf ogt, %76, %77 : vector<8x512xf32>
    %cst_43 = arith.constant 2.000000e-01 : f32
    %79 = vector.broadcast %cst_43 : f32 to vector<8x512xf32>
    %80 = arith.mulf %79, %76 : vector<8x512xf32>
    %81 = arith.select %78, %76, %80 : vector<8x512xi1>, vector<8x512xf32>
    %82 = arith.truncf %81 : vector<8x512xf32> to vector<8x512xbf16>
    %c0_44 = arith.constant 0 : index
    %c0_45 = arith.constant 0 : index
    %83 = vector.load %arg14[%c0_44, %c0_45] : memref<512x128xbf16, #tpu.memory_space<vmem>>, vector<512x128xbf16>
    %cst_46 = arith.constant dense<0.000000e+00> : vector<8x128xf32>
    %84 = tpu.matmul %82, %83, %cst_46 {dimension_numbers = #tpu.dot_dimension_numbers<[1], [0], [0], [1], [0, 0, 1, 1], [], []>} : vector<8x512xbf16>, vector<512x128xbf16>, vector<8x128xf32> -> vector<8x128xf32>
    %c0_47 = arith.constant 0 : index
    %c0_48 = arith.constant 0 : index
    %85 = vector.load %arg15[%c0_47, %c0_48] : memref<128x128xbf16, #tpu.memory_space<vmem>>, vector<128x128xbf16>
    %cst_49 = arith.constant dense<0.000000e+00> : vector<8x128xf32>
    %86 = tpu.matmul %0, %85, %cst_49 {dimension_numbers = #tpu.dot_dimension_numbers<[1], [0], [0], [1], [0, 0, 1, 1], [], []>} : vector<8x128xbf16>, vector<128x128xbf16>, vector<8x128xf32> -> vector<8x128xf32>
    %87 = arith.addf %84, %86 : vector<8x128xf32>
    %c0_50 = arith.constant 0 : index
    %c0_51 = arith.constant 0 : index
    %88 = vector.load %arg16[%c0_50, %c0_51] : memref<128x128xbf16, #tpu.memory_space<vmem>>, vector<128x128xbf16>
    %cst_52 = arith.constant dense<0.000000e+00> : vector<8x128xf32>
    %89 = tpu.matmul %1, %88, %cst_52 {dimension_numbers = #tpu.dot_dimension_numbers<[1], [0], [0], [1], [0, 0, 1, 1], [], []>} : vector<8x128xbf16>, vector<128x128xbf16>, vector<8x128xf32> -> vector<8x128xf32>
    %90 = arith.addf %87, %89 : vector<8x128xf32>
    %c0_53 = arith.constant 0 : index
    %c0_54 = arith.constant 0 : index
    %91 = vector.load %arg17[%c0_53, %c0_54] : memref<64x128xbf16, #tpu.memory_space<vmem>>, vector<64x128xbf16>
    %cst_55 = arith.constant dense<0.000000e+00> : vector<8x128xf32>
    %92 = tpu.matmul %2, %91, %cst_55 {dimension_numbers = #tpu.dot_dimension_numbers<[1], [0], [0], [1], [0, 0, 1, 1], [], []>} : vector<8x64xbf16>, vector<64x128xbf16>, vector<8x128xf32> -> vector<8x128xf32>
    %93 = arith.addf %90, %92 : vector<8x128xf32>
    %c0_56 = arith.constant 0 : index
    %c0_57 = arith.constant 0 : index
    %94 = vector.load %arg18[%c0_56, %c0_57] : memref<1x128xf32, #tpu.memory_space<vmem>>, vector<1x128xf32>
    %95 = vector.broadcast %94 : vector<1x128xf32> to vector<8x128xf32>
    %96 = arith.addf %93, %95 : vector<8x128xf32>
    %c0_58 = arith.constant 0 : index
    %c0_59 = arith.constant 0 : index
    %97 = vector.load %arg19[%c0_58, %c0_59] : memref<8x128xf32, #tpu.memory_space<vmem>>, vector<8x128xf32>
    tpu.vector_store %arg19[%c0_58, %c0_59], %96 {strides = array<i32>} : memref<8x128xf32, #tpu.memory_space<vmem>>, vector<8x128xf32>,
    return
  }
  func.func @transform_0(%arg0: i32) -> (i32, i32) {
    %c0_i32 = arith.constant 0 : i32
    %c0_i32_0 = arith.constant 0 : i32
    return %arg0, %c0_i32 : i32, i32
  }
  func.func @transform_1(%arg0: i32) -> (i32, i32) {
    %c0_i32 = arith.constant 0 : i32
    %c0_i32_0 = arith.constant 0 : i32
    return %arg0, %c0_i32 : i32, i32
  }
  func.func @transform_2(%arg0: i32) -> (i32, i32) {
    %c0_i32 = arith.constant 0 : i32
    %c0_i32_0 = arith.constant 0 : i32
    return %arg0, %c0_i32 : i32, i32
  }
  func.func @transform_3(%arg0: i32) -> (i32, i32) {
    %c0_i32 = arith.constant 0 : i32
    %c0_i32_0 = arith.constant 0 : i32
    %c0_i32_1 = arith.constant 0 : i32
    return %c0_i32, %c0_i32_0 : i32, i32
  }
  func.func @transform_4(%arg0: i32) -> (i32, i32) {
    %c0_i32 = arith.constant 0 : i32
    %c0_i32_0 = arith.constant 0 : i32
    %c0_i32_1 = arith.constant 0 : i32
    return %c0_i32, %c0_i32_0 : i32, i32
  }
  func.func @transform_5(%arg0: i32) -> (i32, i32) {
    %c0_i32 = arith.constant 0 : i32
    %c0_i32_0 = arith.constant 0 : i32
    %c0_i32_1 = arith.constant 0 : i32
    return %c0_i32, %c0_i32_0 : i32, i32
  }
  func.func @transform_6(%arg0: i32) -> (i32, i32) {
    %c0_i32 = arith.constant 0 : i32
    %c0_i32_0 = arith.constant 0 : i32
    %c0_i32_1 = arith.constant 0 : i32
    return %c0_i32, %c0_i32_0 : i32, i32
  }
  func.func @transform_7(%arg0: i32) -> (i32, i32) {
    %c0_i32 = arith.constant 0 : i32
    %c0_i32_0 = arith.constant 0 : i32
    %c0_i32_1 = arith.constant 0 : i32
    return %c0_i32, %c0_i32_0 : i32, i32
  }
  func.func @transform_8(%arg0: i32) -> (i32, i32) {
    %c0_i32 = arith.constant 0 : i32
    %c0_i32_0 = arith.constant 0 : i32
    %c0_i32_1 = arith.constant 0 : i32
    return %c0_i32, %c0_i32_0 : i32, i32
  }
  func.func @transform_9(%arg0: i32) -> (i32, i32) {
    %c0_i32 = arith.constant 0 : i32
    %c0_i32_0 = arith.constant 0 : i32
    %c0_i32_1 = arith.constant 0 : i32
    return %c0_i32, %c0_i32_0 : i32, i32
  }
  func.func @transform_10(%arg0: i32) -> (i32, i32) {
    %c0_i32 = arith.constant 0 : i32
    %c0_i32_0 = arith.constant 0 : i32
    %c0_i32_1 = arith.constant 0 : i32
    return %c0_i32, %c0_i32_0 : i32, i32
  }
  func.func @transform_11(%arg0: i32) -> (i32, i32) {
    %c0_i32 = arith.constant 0 : i32
    %c0_i32_0 = arith.constant 0 : i32
    %c0_i32_1 = arith.constant 0 : i32
    return %c0_i32, %c0_i32_0 : i32, i32
  }
  func.func @transform_12(%arg0: i32) -> (i32, i32) {
    %c0_i32 = arith.constant 0 : i32
    %c0_i32_0 = arith.constant 0 : i32
    %c0_i32_1 = arith.constant 0 : i32
    return %c0_i32, %c0_i32_0 : i32, i32
  }
  func.func @transform_13(%arg0: i32) -> (i32, i32) {
    %c0_i32 = arith.constant 0 : i32
    %c0_i32_0 = arith.constant 0 : i32
    %c0_i32_1 = arith.constant 0 : i32
    return %c0_i32, %c0_i32_0 : i32, i32
  }
  func.func @transform_14(%arg0: i32) -> (i32, i32) {
    %c0_i32 = arith.constant 0 : i32
    %c0_i32_0 = arith.constant 0 : i32
    %c0_i32_1 = arith.constant 0 : i32
    return %c0_i32, %c0_i32_0 : i32, i32
  }
  func.func @transform_15(%arg0: i32) -> (i32, i32) {
    %c0_i32 = arith.constant 0 : i32
    %c0_i32_0 = arith.constant 0 : i32
    %c0_i32_1 = arith.constant 0 : i32
    return %c0_i32, %c0_i32_0 : i32, i32
  }
  func.func @transform_16(%arg0: i32) -> (i32, i32) {
    %c0_i32 = arith.constant 0 : i32
    %c0_i32_0 = arith.constant 0 : i32
    %c0_i32_1 = arith.constant 0 : i32
    return %c0_i32, %c0_i32_0 : i32, i32
  }
  func.func @transform_17(%arg0: i32) -> (i32, i32) {
    %c0_i32 = arith.constant 0 : i32
    %c0_i32_0 = arith.constant 0 : i32
    %c0_i32_1 = arith.constant 0 : i32
    return %c0_i32, %c0_i32_0 : i32, i32
  }
  func.func @transform_18(%arg0: i32) -> (i32, i32) {
    %c0_i32 = arith.constant 0 : i32
    %c0_i32_0 = arith.constant 0 : i32
    return %arg0, %c0_i32 : i32, i32
  }
}

</mosaic_0001>

<llo_original>
// kernel: generator_forward.1
$region0: #{generator_forward.1}
  #allocation0 [shape = 'u32[]', space=smem, size = 0x4, offset = 0x4, fixed_abs, tag = 'smem constant byte address 0x4 - core index']
  #allocation1 [shape = 'u32[144,128]{1,0:T(1,128)}', space=vmem, size = 0x12000, scoped, tag = 'internal scratch']
  %s0 = inlined_call_operand.vmem [shape: bf16[8,128], index: 0, kind: input, shape index: {}]
  %s1 = inlined_call_operand.vmem [shape: bf16[8,128], index: 1, kind: input, shape index: {}]
  %s2 = inlined_call_operand.vmem [shape: bf16[8,64], index: 2, kind: input, shape index: {}]
  %s3 = inlined_call_operand.hbm [shape: bf16[128,512], index: 3, kind: input, shape index: {}]
  %s4 = inlined_call_operand.hbm [shape: bf16[128,512], index: 4, kind: input, shape index: {}]
  %s5 = inlined_call_operand.hbm [shape: bf16[64,512], index: 5, kind: input, shape index: {}]
  %s6 = inlined_call_operand.hbm [shape: f32[1,512], index: 6, kind: input, shape index: {}]
  %s7 = inlined_call_operand.hbm [shape: f32[1,512], index: 7, kind: input, shape index: {}]
  %s8 = inlined_call_operand.hbm [shape: f32[1,512], index: 8, kind: input, shape index: {}]
  %s9 = inlined_call_operand.hbm [shape: bf16[512,512], index: 9, kind: input, shape index: {}]
  %s10 = inlined_call_operand.hbm [shape: f32[1,512], index: 10, kind: input, shape index: {}]
  %s11 = inlined_call_operand.hbm [shape: f32[1,512], index: 11, kind: input, shape index: {}]
  %s12 = inlined_call_operand.hbm [shape: f32[1,512], index: 12, kind: input, shape index: {}]
  %s13 = inlined_call_operand.hbm [shape: bf16[512,128], index: 13, kind: input, shape index: {}]
  %s14 = inlined_call_operand.vmem [shape: bf16[128,128], index: 14, kind: input, shape index: {}]
  %s15 = inlined_call_operand.hbm [shape: bf16[128,128], index: 15, kind: input, shape index: {}]
  %s16 = inlined_call_operand.hbm [shape: bf16[64,128], index: 16, kind: input, shape index: {}]
  %s17 = inlined_call_operand.hbm [shape: f32[1,128], index: 17, kind: input, shape index: {}]
  %s18 = inlined_call_operand.hbm [shape: f32[8,128], index: 18, kind: output, shape index: {}]
  %s19 = sld [smem:[#allocation0]]
  $region138: #{generator_forward.1} parent=0
    _
  %s21 = ssub.s32 1, %s19
  %s22 = scalar_select 0, %s21, %s19
  $region1: #{generator_forward.1} parent=0
    #allocation2 [shape = 'u8[131072]{0}', space=vmem, size = 0x20000, scoped, tag = 'input window, operand 3, single buffered']
    #allocation3 [shape = 's32[1]{0}', space=sflag, size = 0x4, scoped, tag = 'scoped memory for generator_forward.1']
    #allocation4 [shape = 's32[1]{0}', space=sflag, size = 0x4, scoped, tag = 'scoped memory for generator_forward.1']
    #allocation5 [shape = 'u8[131072]{0}', space=vmem, size = 0x20000, scoped, tag = 'input window, operand 4, single buffered']
    #allocation6 [shape = 's32[1]{0}', space=sflag, size = 0x4, scoped, tag = 'scoped memory for generator_forward.1']
    #allocation7 [shape = 'u8[65536]{0}', space=vmem, size = 0x10000, scoped, tag = 'input window, operand 5, single buffered']
    #allocation8 [shape = 'u8[2048]{0}', space=vmem, size = 0x800, scoped, tag = 'input window, operand 6, single buffered']
    #allocation9 [shape = 's32[1]{0}', space=sflag, size = 0x4, scoped, tag = 'scoped memory for generator_forward.1']
    #allocation10 [shape = 'u8[2048]{0}', space=vmem, size = 0x800, scoped, tag = 'input window, operand 7, single buffered']
    #allocation11 [shape = 'u8[2048]{0}', space=vmem, size = 0x800, scoped, tag = 'input window, operand 8, single buffered']
    #allocation12 [shape = 's32[1]{0}', space=sflag, size = 0x4, scoped, tag = 'scoped memory for generator_forward.1']
    #allocation13 [shape = 'u8[524288]{0}', space=vmem, size = 0x80000, scoped, tag = 'input window, operand 9, single buffered']
    #allocation14 [shape = 'u8[2048]{0}', space=vmem, size = 0x800, scoped, tag = 'input window, operand 10, single buffered']
    #allocation15 [shape = 's32[1]{0}', space=sflag, size = 0x4, scoped, tag = 'scoped memory for generator_forward.1']
    #allocation16 [shape = 'u8[2048]{0}', space=vmem, size = 0x800, scoped, tag = 'input window, operand 11, single buffered']
    #allocation17 [shape = 'u8[2048]{0}', space=vmem, size = 0x800, scoped, tag = 'input window, operand 12, single buffered']
    #allocation18 [shape = 's32[1]{0}', space=sflag, size = 0x4, scoped, tag = 'scoped memory for generator_forward.1']
    #allocation19 [shape = 'u8[131072]{0}', space=vmem, size = 0x20000, scoped, tag = 'input window, operand 13, single buffered']
    #allocation20 [shape = 'u8[32768]{0}', space=vmem, size = 0x8000, scoped, tag = 'input window, operand 15, single buffered']
    #allocation21 [shape = 's32[1]{0}', space=sflag, size = 0x4, scoped, tag = 'scoped memory for generator_forward.1']
    #allocation22 [shape = 'u8[16384]{0}', space=vmem, size = 0x4000, scoped, tag = 'input window, operand 16, single buffered']
    #allocation23 [shape = 'u8[512]{0}', space=vmem, size = 0x400, scoped, tag = 'input window, operand 17, single buffered']
    #allocation24 [shape = 's32[1]{0}', space=sflag, size = 0x4, scoped, tag = 'scoped memory for generator_forward.1']
    #allocation25 [shape = 'u8[4096]{0}', space=vmem, size = 0x1000, scoped, tag = 'output window, operand 0, single buffered']
    %23 = vsyncpa [#allocation3], 0
    %24 = vsyncpa [#allocation6], 0
    %25 = vsyncpa [#allocation9], 0
    %26 = vsyncpa [#allocation12], 0
    %27 = vsyncpa [#allocation15], 0
    %28 = vsyncpa [#allocation18], 0
    %29 = vsyncpa [#allocation21], 0
    %30 = vsyncpa [#allocation24], 0
    %31 = vsyncpa [#allocation4], 0
    // Predicated region
    $region2: #{generator_forward.1} parent=1 // pred_check
      _
    $region3: #{generator_forward.1} parent=1 // pred_check_branch
      %33 = sbr.rel (0) target = $region5
    $region4: #{generator_forward.1} parent=1 // pred_region
      _
    $region5: #{generator_forward.1} parent=1 // pred_fallthru
      _
    // Predicated region
    $region6: #{generator_forward.1} parent=1 // pred_check
      _
    $region7: #{generator_forward.1} parent=1 // pred_check_branch
      %35 = sbr.rel (0) target = $region9
    $region8: #{generator_forward.1} parent=1 // pred_region
      _
    $region9: #{generator_forward.1} parent=1 // pred_fallthru
      _
    // Predicated region
    $region10: #{generator_forward.1} parent=1 // pred_check
      _
    $region11: #{generator_forward.1} parent=1 // pred_check_branch
      %37 = sbr.rel (0) target = $region13
    $region12: #{generator_forward.1} parent=1 // pred_region
      _
    $region13: #{generator_forward.1} parent=1 // pred_fallthru
      _
    // Predicated region
    $region14: #{generator_forward.1} parent=1 // pred_check
      _
    $region15: #{generator_forward.1} parent=1 // pred_check_branch
      %39 = sbr.rel (0) target = $region17
    $region16: #{generator_forward.1} parent=1 // pred_region
      %s41 = ssub.s32 4096, 4096
      %42 = vsyncadd [#allocation3], %s41
      %s43 = sshll.u32 [#allocation2], 4
      %s44 = int_to_ptr.vmem [resolvable:$true] %s43
      %49 = dma.hbm_to_vmem [thread:$0]  %s3, 4096, %s44, [#allocation3], 256, 256, 16
    $region17: #{generator_forward.1} parent=1 // pred_fallthru
      _
    // Predicated region
    $region18: #{generator_forward.1} parent=1 // pred_check
      _
    $region19: #{generator_forward.1} parent=1 // pred_check_branch
      %51 = sbr.rel (0) target = $region21
    $region20: #{generator_forward.1} parent=1 // pred_region
      %s53 = ssub.s32 4096, 4096
      %54 = vsyncadd [#allocation6], %s53
      %s55 = sshll.u32 [#allocation5], 4
      %s56 = int_to_ptr.vmem [resolvable:$true] %s55
      %61 = dma.hbm_to_vmem [thread:$0]  %s4, 4096, %s56, [#allocation6], 256, 256, 16
    $region21: #{generator_forward.1} parent=1 // pred_fallthru
      _
    // Predicated region
    $region22: #{generator_forward.1} parent=1 // pred_check
      _
    $region23: #{generator_forward.1} parent=1 // pred_check_branch
      %63 = sbr.rel (0) target = $region25
    $region24: #{generator_forward.1} parent=1 // pred_region
      %s65 = ssub.s32 2048, 2048
      %66 = vsyncadd [#allocation6], %s65
      %s67 = sshll.u32 [#allocation7], 4
      %s68 = int_to_ptr.vmem [resolvable:$true] %s67
      %73 = dma.hbm_to_vmem [thread:$0]  %s5, 2048, %s68, [#allocation6], 256, 256, 16
    $region25: #{generator_forward.1} parent=1 // pred_fallthru
      _
    // Predicated region
    $region26: #{generator_forward.1} parent=1 // pred_check
      _
    $region27: #{generator_forward.1} parent=1 // pred_check_branch
      %75 = sbr.rel (0) target = $region29
    $region28: #{generator_forward.1} parent=1 // pred_region
      %s77 = ssub.s32 64, 64
      %78 = vsyncadd [#allocation9], %s77
      %s80 = sshll.u32 [#allocation8], 4
      %s81 = int_to_ptr.vmem [resolvable:$true] %s80
      %83 = dma.hbm_to_vmem [thread:$0]  %s6, 64, %s81, [#allocation9]
    $region29: #{generator_forward.1} parent=1 // pred_fallthru
      _
    // Predicated region
    $region30: #{generator_forward.1} parent=1 // pred_check
      _
    $region31: #{generator_forward.1} parent=1 // pred_check_branch
      %85 = sbr.rel (0) target = $region33
    $region32: #{generator_forward.1} parent=1 // pred_region
      %s87 = ssub.s32 64, 64
      %88 = vsyncadd [#allocation9], %s87
      %s90 = sshll.u32 [#allocation10], 4
      %s91 = int_to_ptr.vmem [resolvable:$true] %s90
      %93 = dma.hbm_to_vmem [thread:$0]  %s7, 64, %s91, [#allocation9]
    $region33: #{generator_forward.1} parent=1 // pred_fallthru
      _
    // Predicated region
    $region34: #{generator_forward.1} parent=1 // pred_check
      _
    $region35: #{generator_forward.1} parent=1 // pred_check_branch
      %95 = sbr.rel (0) target = $region37
    $region36: #{generator_forward.1} parent=1 // pred_region
      %s97 = ssub.s32 64, 64
      %98 = vsyncadd [#allocation12], %s97
      %s100 = sshll.u32 [#allocation11], 4
      %s101 = int_to_ptr.vmem [resolvable:$true] %s100
      %103 = dma.hbm_to_vmem [thread:$0]  %s8, 64, %s101, [#allocation12]
    $region37: #{generator_forward.1} parent=1 // pred_fallthru
      _
    // Predicated region
    $region38: #{generator_forward.1} parent=1 // pred_check
      _
    $region39: #{generator_forward.1} parent=1 // pred_check_branch
      %105 = sbr.rel (0) target = $region41
    $region40: #{generator_forward.1} parent=1 // pred_region
      %s107 = ssub.s32 16384, 16384
      %108 = vsyncadd [#allocation12], %s107
      %s109 = sshll.u32 [#allocation13], 4
      %s110 = int_to_ptr.vmem [resolvable:$true] %s109
      %115 = dma.hbm_to_vmem [thread:$0]  %s9, 16384, %s110, [#allocation12], 256, 256, 16
    $region41: #{generator_forward.1} parent=1 // pred_fallthru
      _
    // Predicated region
    $region42: #{generator_forward.1} parent=1 // pred_check
      _
    $region43: #{generator_forward.1} parent=1 // pred_check_branch
      %117 = sbr.rel (0) target = $region45
    $region44: #{generator_forward.1} parent=1 // pred_region
      %s119 = ssub.s32 64, 64
      %120 = vsyncadd [#allocation15], %s119
      %s122 = sshll.u32 [#allocation14], 4
      %s123 = int_to_ptr.vmem [resolvable:$true] %s122
      %125 = dma.hbm_to_vmem [thread:$0]  %s10, 64, %s123, [#allocation15]
    $region45: #{generator_forward.1} parent=1 // pred_fallthru
      _
    // Predicated region
    $region46: #{generator_forward.1} parent=1 // pred_check
      _
    $region47: #{generator_forward.1} parent=1 // pred_check_branch
      %127 = sbr.rel (0) target = $region49
    $region48: #{generator_forward.1} parent=1 // pred_region
      %s129 = ssub.s32 64, 64
      %130 = vsyncadd [#allocation15], %s129
      %s132 = sshll.u32 [#allocation16], 4
      %s133 = int_to_ptr.vmem [resolvable:$true] %s132
      %135 = dma.hbm_to_vmem [thread:$0]  %s11, 64, %s133, [#allocation15]
    $region49: #{generator_forward.1} parent=1 // pred_fallthru
      _
    // Predicated region
    $region50: #{generator_forward.1} parent=1 // pred_check
      _
    $region51: #{generator_forward.1} parent=1 // pred_check_branch
      %137 = sbr.rel (0) target = $region53
    $region52: #{generator_forward.1} parent=1 // pred_region
      %s139 = ssub.s32 64, 64
      %140 = vsyncadd [#allocation18], %s139
      %s142 = sshll.u32 [#allocation17], 4
      %s143 = int_to_ptr.vmem [resolvable:$true] %s142
      %145 = dma.hbm_to_vmem [thread:$0]  %s12, 64, %s143, [#allocation18]
    $region53: #{generator_forward.1} parent=1 // pred_fallthru
      _
    // Predicated region
    $region54: #{generator_forward.1} parent=1 // pred_check
      _
    $region55: #{generator_forward.1} parent=1 // pred_check_branch
      %147 = sbr.rel (0) target = $region57
    $region56: #{generator_forward.1} parent=1 // pred_region
      %s149 = ssub.s32 4096, 4096
      %150 = vsyncadd [#allocation18], %s149
      %s151 = sshll.u32 [#allocation19], 4
      %s152 = int_to_ptr.vmem [resolvable:$true] %s151
      %157 = dma.hbm_to_vmem [thread:$0]  %s13, 4096, %s152, [#allocation18], 64, 64, 4
    $region57: #{generator_forward.1} parent=1 // pred_fallthru
      _
    // Predicated region
    $region58: #{generator_forward.1} parent=1 // pred_check
      _
    $region59: #{generator_forward.1} parent=1 // pred_check_branch
      %159 = sbr.rel (0) target = $region61
    $region60: #{generator_forward.1} parent=1 // pred_region
      _
    $region61: #{generator_forward.1} parent=1 // pred_fallthru
      _
    // Predicated region
    $region62: #{generator_forward.1} parent=1 // pred_check
      _
    $region63: #{generator_forward.1} parent=1 // pred_check_branch
      %161 = sbr.rel (0) target = $region65
    $region64: #{generator_forward.1} parent=1 // pred_region
      %s163 = ssub.s32 1024, 1024
      %164 = vsyncadd [#allocation21], %s163
      %s165 = sshll.u32 [#allocation20], 4
      %s166 = int_to_ptr.vmem [resolvable:$true] %s165
      %171 = dma.hbm_to_vmem [thread:$0]  %s15, 1024, %s166, [#allocation21], 64, 64, 4
    $region65: #{generator_forward.1} parent=1 // pred_fallthru
      _
    // Predicated region
    $region66: #{generator_forward.1} parent=1 // pred_check
      _
    $region67: #{generator_forward.1} parent=1 // pred_check_branch
      %173 = sbr.rel (0) target = $region69
    $region68: #{generator_forward.1} parent=1 // pred_region
      %s175 = ssub.s32 512, 512
      %176 = vsyncadd [#allocation21], %s175
      %s177 = sshll.u32 [#allocation22], 4
      %s178 = int_to_ptr.vmem [resolvable:$true] %s177
      %183 = dma.hbm_to_vmem [thread:$0]  %s16, 512, %s178, [#allocation21], 64, 64, 4
    $region69: #{generator_forward.1} parent=1 // pred_fallthru
      _
    // Predicated region
    $region70: #{generator_forward.1} parent=1 // pred_check
      _
    $region71: #{generator_forward.1} parent=1 // pred_check_branch
      %185 = sbr.rel (0) target = $region73
    $region72: #{generator_forward.1} parent=1 // pred_region
      %s187 = ssub.s32 16, 16
      %188 = vsyncadd [#allocation24], %s187
      %s190 = sshll.u32 [#allocation23], 4
      %s191 = int_to_ptr.vmem [resolvable:$true] %s190
      %193 = dma.hbm_to_vmem [thread:$0]  %s17, 16, %s191, [#allocation24]
    $region73: #{generator_forward.1} parent=1 // pred_fallthru
      _
    // Predicated region
    $region74: #{generator_forward.1} parent=1 // pred_check
      _
    $region75: #{generator_forward.1} parent=1 // pred_check_branch
      %195 = sbr.rel (0) target = $region77
    $region76: #{generator_forward.1} parent=1 // pred_region
      %196 = dma.done [#allocation3], 4096
    $region77: #{generator_forward.1} parent=1 // pred_fallthru
      _
    // Predicated region
    $region78: #{generator_forward.1} parent=1 // pred_check
      _
    $region79: #{generator_forward.1} parent=1 // pred_check_branch
      %198 = sbr.rel (0) target = $region81
    $region80: #{generator_forward.1} parent=1 // pred_region
      %199 = dma.done [#allocation6], 4096
    $region81: #{generator_forward.1} parent=1 // pred_fallthru
      _
    // Predicated region
    $region82: #{generator_forward.1} parent=1 // pred_check
      _
    $region83: #{generator_forward.1} parent=1 // pred_check_branch
      %201 = sbr.rel (0) target = $region85
    $region84: #{generator_forward.1} parent=1 // pred_region
      %202 = dma.done [#allocation6], 2048
    $region85: #{generator_forward.1} parent=1 // pred_fallthru
      _
    // Predicated region
    $region86: #{generator_forward.1} parent=1 // pred_check
      _
    $region87: #{generator_forward.1} parent=1 // pred_check_branch
      %204 = sbr.rel (0) target = $region89
    $region88: #{generator_forward.1} parent=1 // pred_region
      %205 = dma.done [#allocation9], 64
    $region89: #{generator_forward.1} parent=1 // pred_fallthru
      _
    // Predicated region
    $region90: #{generator_forward.1} parent=1 // pred_check
      _
    $region91: #{generator_forward.1} parent=1 // pred_check_branch
      %207 = sbr.rel (0) target = $region93
    $region92: #{generator_forward.1} parent=1 // pred_region
      %208 = dma.done [#allocation9], 64
    $region93: #{generator_forward.1} parent=1 // pred_fallthru
      _
    // Predicated region
    $region94: #{generator_forward.1} parent=1 // pred_check
      _
    $region95: #{generator_forward.1} parent=1 // pred_check_branch
      %210 = sbr.rel (0) target = $region97
    $region96: #{generator_forward.1} parent=1 // pred_region
      %211 = dma.done [#allocation12], 64
    $region97: #{generator_forward.1} parent=1 // pred_fallthru
      _
    // Predicated region
    $region98: #{generator_forward.1} parent=1 // pred_check
      _
    $region99: #{generator_forward.1} parent=1 // pred_check_branch
      %213 = sbr.rel (0) target = $region101
    $region100: #{generator_forward.1} parent=1 // pred_region
      %214 = dma.done [#allocation12], 16384
    $region101: #{generator_forward.1} parent=1 // pred_fallthru
      _
    // Predicated region
    $region102: #{generator_forward.1} parent=1 // pred_check
      _
    $region103: #{generator_forward.1} parent=1 // pred_check_branch
      %216 = sbr.rel (0) target = $region105
    $region104: #{generator_forward.1} parent=1 // pred_region
      %217 = dma.done [#allocation15], 64
    $region105: #{generator_forward.1} parent=1 // pred_fallthru
      _
    // Predicated region
    $region106: #{generator_forward.1} parent=1 // pred_check
      _
    $region107: #{generator_forward.1} parent=1 // pred_check_branch
      %219 = sbr.rel (0) target = $region109
    $region108: #{generator_forward.1} parent=1 // pred_region
      %220 = dma.done [#allocation15], 64
    $region109: #{generator_forward.1} parent=1 // pred_fallthru
      _
    // Predicated region
    $region110: #{generator_forward.1} parent=1 // pred_check
      _
    $region111: #{generator_forward.1} parent=1 // pred_check_branch
      %222 = sbr.rel (0) target = $region113
    $region112: #{generator_forward.1} parent=1 // pred_region
      %223 = dma.done [#allocation18], 64
    $region113: #{generator_forward.1} parent=1 // pred_fallthru
      _
    // Predicated region
    $region114: #{generator_forward.1} parent=1 // pred_check
      _
    $region115: #{generator_forward.1} parent=1 // pred_check_branch
      %225 = sbr.rel (0) target = $region117
    $region116: #{generator_forward.1} parent=1 // pred_region
      %226 = dma.done [#allocation18], 4096
    $region117: #{generator_forward.1} parent=1 // pred_fallthru
      _
    // Predicated region
    $region118: #{generator_forward.1} parent=1 // pred_check
      _
    $region119: #{generator_forward.1} parent=1 // pred_check_branch
      %228 = sbr.rel (0) target = $region121
    $region120: #{generator_forward.1} parent=1 // pred_region
      %229 = dma.done [#allocation21], 1024
    $region121: #{generator_forward.1} parent=1 // pred_fallthru
      _
    // Predicated region
    $region122: #{generator_forward.1} parent=1 // pred_check
      _
    $region123: #{generator_forward.1} parent=1 // pred_check_branch
      %231 = sbr.rel (0) target = $region125
    $region124: #{generator_forward.1} parent=1 // pred_region
      %232 = dma.done [#allocation21], 512
    $region125: #{generator_forward.1} parent=1 // pred_fallthru
      _
    // Predicated region
    $region126: #{generator_forward.1} parent=1 // pred_check
      _
    $region127: #{generator_forward.1} parent=1 // pred_check_branch
      %234 = sbr.rel (0) target = $region129
    $region128: #{generator_forward.1} parent=1 // pred_region
      %235 = dma.done [#allocation24], 16
    $region129: #{generator_forward.1} parent=1 // pred_fallthru
      _
    %v237 = vld [vmem:[%s0] sm:$0xf]
    %v238 = vld [vmem:[%s1] sm:$0xf]
    %v239 = vld [vmem:[%s2] sm:$0xf]
    %v240 = vld [vmem:[#allocation2] sm:$0xff]
    %v241 = vld [vmem:[#allocation2 + $0x8] sm:$0xff]
    %v242 = vld [vmem:[#allocation2 + $0x10] sm:$0xff]
    %v243 = vld [vmem:[#allocation2 + $0x18] sm:$0xff]
    %v244 = vld [vmem:[#allocation2 + $0x20] sm:$0xff]
    %v245 = vld [vmem:[#allocation2 + $0x28] sm:$0xff]
    %v246 = vld [vmem:[#allocation2 + $0x30] sm:$0xff]
    %v247 = vld [vmem:[#allocation2 + $0x38] sm:$0xff]
    %v248 = vld [vmem:[#allocation2 + $0x40] sm:$0xff]
    %v249 = vld [vmem:[#allocation2 + $0x48] sm:$0xff]
    %v250 = vld [vmem:[#allocation2 + $0x50] sm:$0xff]
    %v251 = vld [vmem:[#allocation2 + $0x58] sm:$0xff]
    %v252 = vld [vmem:[#allocation2 + $0x60] sm:$0xff]
    %v253 = vld [vmem:[#allocation2 + $0x68] sm:$0xff]
    %v254 = vld [vmem:[#allocation2 + $0x70] sm:$0xff]
    %v255 = vld [vmem:[#allocation2 + $0x78] sm:$0xff]
    %v256 = vld [vmem:[#allocation2 + $0x80] sm:$0xff]
    %v257 = vld [vmem:[#allocation2 + $0x88] sm:$0xff]
    %v258 = vld [vmem:[#allocation2 + $0x90] sm:$0xff]
    %v259 = vld [vmem:[#allocation2 + $0x98] sm:$0xff]
    %v260 = vld [vmem:[#allocation2 + $0xa0] sm:$0xff]
    %v261 = vld [vmem:[#allocation2 + $0xa8] sm:$0xff]
    %v262 = vld [vmem:[#allocation2 + $0xb0] sm:$0xff]
    %v263 = vld [vmem:[#allocation2 + $0xb8] sm:$0xff]
    %v264 = vld [vmem:[#allocation2 + $0xc0] sm:$0xff]
    %v265 = vld [vmem:[#allocation2 + $0xc8] sm:$0xff]
    %v266 = vld [vmem:[#allocation2 + $0xd0] sm:$0xff]
    %v267 = vld [vmem:[#allocation2 + $0xd8] sm:$0xff]
    %v268 = vld [vmem:[#allocation2 + $0xe0] sm:$0xff]
    %v269 = vld [vmem:[#allocation2 + $0xe8] sm:$0xff]
    %v270 = vld [vmem:[#allocation2 + $0xf0] sm:$0xff]
    %v271 = vld [vmem:[#allocation2 + $0xf8] sm:$0xff]
    %v272 = vld [vmem:[#allocation5] sm:$0xff]
    %v273 = vld [vmem:[#allocation5 + $0x8] sm:$0xff]
    %v274 = vld [vmem:[#allocation5 + $0x10] sm:$0xff]
    %v275 = vld [vmem:[#allocation5 + $0x18] sm:$0xff]
    %v276 = vld [vmem:[#allocation5 + $0x20] sm:$0xff]
    %v277 = vld [vmem:[#allocation5 + $0x28] sm:$0xff]
    %v278 = vld [vmem:[#allocation5 + $0x30] sm:$0xff]
    %v279 = vld [vmem:[#allocation5 + $0x38] sm:$0xff]
    %v280 = vld [vmem:[#allocation5 + $0x40] sm:$0xff]
    %v281 = vld [vmem:[#allocation5 + $0x48] sm:$0xff]
    %v282 = vld [vmem:[#allocation5 + $0x50] sm:$0xff]
    %v283 = vld [vmem:[#allocation5 + $0x58] sm:$0xff]
    %v284 = vld [vmem:[#allocation5 + $0x60] sm:$0xff]
    %v285 = vld [vmem:[#allocation5 + $0x68] sm:$0xff]
    %v286 = vld [vmem:[#allocation5 + $0x70] sm:$0xff]
    %v287 = vld [vmem:[#allocation5 + $0x78] sm:$0xff]
    %v288 = vld [vmem:[#allocation5 + $0x80] sm:$0xff]
    %v289 = vld [vmem:[#allocation5 + $0x88] sm:$0xff]
    %v290 = vld [vmem:[#allocation5 + $0x90] sm:$0xff]
    %v291 = vld [vmem:[#allocation5 + $0x98] sm:$0xff]
    %v292 = vld [vmem:[#allocation5 + $0xa0] sm:$0xff]
    %v293 = vld [vmem:[#allocation5 + $0xa8] sm:$0xff]
    %v294 = vld [vmem:[#allocation5 + $0xb0] sm:$0xff]
    %v295 = vld [vmem:[#allocation5 + $0xb8] sm:$0xff]
    %v296 = vld [vmem:[#allocation5 + $0xc0] sm:$0xff]
    %v297 = vld [vmem:[#allocation5 + $0xc8] sm:$0xff]
    %v298 = vld [vmem:[#allocation5 + $0xd0] sm:$0xff]
    %v299 = vld [vmem:[#allocation5 + $0xd8] sm:$0xff]
    %v300 = vld [vmem:[#allocation5 + $0xe0] sm:$0xff]
    %v301 = vld [vmem:[#allocation5 + $0xe8] sm:$0xff]
    %v302 = vld [vmem:[#allocation5 + $0xf0] sm:$0xff]
    %v303 = vld [vmem:[#allocation5 + $0xf8] sm:$0xff]
    %v336 = vunpack.c.l.b16 %v272
    %v337 = vunpack.c.h.b16 %v272
    %v338 = vunpack.c.l.b16 %v273
    %v339 = vunpack.c.h.b16 %v273
    %v340 = vunpack.c.l.b16 %v274
    %v341 = vunpack.c.h.b16 %v274
    %v342 = vunpack.c.l.b16 %v275
    %v343 = vunpack.c.h.b16 %v275
    %v344 = vunpack.c.l.b16 %v276
    %v345 = vunpack.c.h.b16 %v276
    %v346 = vunpack.c.l.b16 %v277
    %v347 = vunpack.c.h.b16 %v277
    %v348 = vunpack.c.l.b16 %v278
    %v349 = vunpack.c.h.b16 %v278
    %v350 = vunpack.c.l.b16 %v279
    %v351 = vunpack.c.h.b16 %v279
    %v352 = vunpack.c.l.b16 %v280
    %v353 = vunpack.c.h.b16 %v280
    %v354 = vunpack.c.l.b16 %v281
    %v355 = vunpack.c.h.b16 %v281
    %v356 = vunpack.c.l.b16 %v282
    %v357 = vunpack.c.h.b16 %v282
    %v358 = vunpack.c.l.b16 %v283
    %v359 = vunpack.c.h.b16 %v283
    %v360 = vunpack.c.l.b16 %v284
    %v361 = vunpack.c.h.b16 %v284
    %v362 = vunpack.c.l.b16 %v285
    %v363 = vunpack.c.h.b16 %v285
    %v364 = vunpack.c.l.b16 %v286
    %v365 = vunpack.c.h.b16 %v286
    %v366 = vunpack.c.l.b16 %v287
    %v367 = vunpack.c.h.b16 %v287
    %v368 = vunpack.c.l.b16 %v288
    %v369 = vunpack.c.h.b16 %v288
    %v370 = vunpack.c.l.b16 %v289
    %v371 = vunpack.c.h.b16 %v289
    %v372 = vunpack.c.l.b16 %v290
    %v373 = vunpack.c.h.b16 %v290
    %v374 = vunpack.c.l.b16 %v291
    %v375 = vunpack.c.h.b16 %v291
    %v376 = vunpack.c.l.b16 %v292
    %v377 = vunpack.c.h.b16 %v292
    %v378 = vunpack.c.l.b16 %v293
    %v379 = vunpack.c.h.b16 %v293
    %v380 = vunpack.c.l.b16 %v294
    %v381 = vunpack.c.h.b16 %v294
    %v382 = vunpack.c.l.b16 %v295
    %v383 = vunpack.c.h.b16 %v295
    %v384 = vunpack.c.l.b16 %v296
    %v385 = vunpack.c.h.b16 %v296
    %v386 = vunpack.c.l.b16 %v297
    %v387 = vunpack.c.h.b16 %v297
    %v388 = vunpack.c.l.b16 %v298
    %v389 = vunpack.c.h.b16 %v298
    %v390 = vunpack.c.l.b16 %v299
    %v391 = vunpack.c.h.b16 %v299
    %v392 = vunpack.c.l.b16 %v300
    %v393 = vunpack.c.h.b16 %v300
    %v394 = vunpack.c.l.b16 %v301
    %v395 = vunpack.c.h.b16 %v301
    %v396 = vunpack.c.l.b16 %v302
    %v397 = vunpack.c.h.b16 %v302
    %v398 = vunpack.c.l.b16 %v303
    %v399 = vunpack.c.h.b16 %v303
    %v400 = vpack.c.b16 %v340, %v336
    %v401 = vpack.c.b16 %v341, %v337
    %v402 = vpack.c.b16 %v342, %v338
    %v403 = vpack.c.b16 %v343, %v339
    %v404 = vpack.c.b16 %v348, %v344
    %v405 = vpack.c.b16 %v349, %v345
    %v406 = vpack.c.b16 %v350, %v346
    %v407 = vpack.c.b16 %v351, %v347
    %v408 = vpack.c.b16 %v356, %v352
    %v409 = vpack.c.b16 %v357, %v353
    %v410 = vpack.c.b16 %v358, %v354
    %v411 = vpack.c.b16 %v359, %v355
    %v412 = vpack.c.b16 %v364, %v360
    %v413 = vpack.c.b16 %v365, %v361
    %v414 = vpack.c.b16 %v366, %v362
    %v415 = vpack.c.b16 %v367, %v363
    %v416 = vpack.c.b16 %v372, %v368
    %v417 = vpack.c.b16 %v373, %v369
    %v418 = vpack.c.b16 %v374, %v370
    %v419 = vpack.c.b16 %v375, %v371
    %v420 = vpack.c.b16 %v380, %v376
    %v421 = vpack.c.b16 %v381, %v377
    %v422 = vpack.c.b16 %v382, %v378
    %v423 = vpack.c.b16 %v383, %v379
    %v424 = vpack.c.b16 %v388, %v384
    %v425 = vpack.c.b16 %v389, %v385
    %v426 = vpack.c.b16 %v390, %v386
    %v427 = vpack.c.b16 %v391, %v387
    %v428 = vpack.c.b16 %v396, %v392
    %v429 = vpack.c.b16 %v397, %v393
    %v430 = vpack.c.b16 %v398, %v394
    %v431 = vpack.c.b16 %v399, %v395
    %464 = vmatprep.subr.bf16.mxu0 %v401
    %465 = vmatpush1.bf16.msra.mxu0 %v400
    %466 = vmatprep.subr.bf16.mxu0 %v405
    %467 = vmatpush1.bf16.msra.mxu0 %v404
    %468 = vmatprep.subr.bf16.mxu0 %v409
    %469 = vmatpush1.bf16.msra.mxu0 %v408
    %470 = vmatprep.subr.bf16.mxu0 %v413
    %471 = vmatpush1.bf16.msra.mxu0 %v412
    %472 = vmatprep.subr.bf16.mxu0 %v417
    %473 = vmatpush1.bf16.msra.mxu0 %v416
    %474 = vmatprep.subr.bf16.mxu0 %v421
    %475 = vmatpush1.bf16.msra.mxu0 %v420
    %476 = vmatprep.subr.bf16.mxu0 %v425
    %477 = vmatpush1.bf16.msra.mxu0 %v424
    %478 = vmatprep.subr.bf16.mxu0 %v429
    %479 = vmatpush1.bf16.msra.mxu0 %v428
    %480 = vmatprep.subr.bf16.mxu0 0
    %481 = vmatpush1.bf16.msra.mxu0 0
    %482 = vmatprep.subr.bf16.mxu0 0
    %483 = vmatpush1.bf16.msra.mxu0 0
    %484 = vmatprep.subr.bf16.mxu0 0
    %485 = vmatpush1.bf16.msra.mxu0 0
    %486 = vmatprep.subr.bf16.mxu0 0
    %487 = vmatpush1.bf16.msra.mxu0 0
    %488 = vmatprep.subr.bf16.mxu0 0
    %489 = vmatpush1.bf16.msra.mxu0 0
    %490 = vmatprep.subr.bf16.mxu0 0
    %491 = vmatpush1.bf16.msra.mxu0 0
    %492 = vmatprep.subr.bf16.mxu0 0
    %493 = vmatpush1.bf16.msra.mxu0 0
    %494 = vmatprep.subr.bf16.mxu0 0
    %495 = vmatpush1.bf16.msra.mxu0 0
    %496 = vmatprep.mubr.bf16.mxu0 0
    %497 = vmatmul.mubr.bf16.gmra.mrb[0].mxu0 %v238
    %v498 = vpop.f32.mrb[0].mxu0
    %v499 = vadd.f32 0.0, %v498
    %v500 = vpop.f32.mrb[0].mxu0
    %v501 = vadd.f32 0.0, %v500
    %v502 = vpop.f32.mrb[0].mxu0
    %v503 = vpop.f32.mrb[0].mxu0
    %504 = vdwg.mxu0
    %505 = vmatprep.subr.bf16.mxu0 %v403
    %506 = vmatpush1.bf16.msra.mxu0 %v402
    %507 = vmatprep.subr.bf16.mxu0 %v407
    %508 = vmatpush1.bf16.msra.mxu0 %v406
    %509 = vmatprep.subr.bf16.mxu0 %v411
    %510 = vmatpush1.bf16.msra.mxu0 %v410
    %511 = vmatprep.subr.bf16.mxu0 %v415
    %512 = vmatpush1.bf16.msra.mxu0 %v414
    %513 = vmatprep.subr.bf16.mxu0 %v419
    %514 = vmatpush1.bf16.msra.mxu0 %v418
    %515 = vmatprep.subr.bf16.mxu0 %v423
    %516 = vmatpush1.bf16.msra.mxu0 %v422
    %517 = vmatprep.subr.bf16.mxu0 %v427
    %518 = vmatpush1.bf16.msra.mxu0 %v426
    %519 = vmatprep.subr.bf16.mxu0 %v431
    %520 = vmatpush1.bf16.msra.mxu0 %v430
    %521 = vmatprep.subr.bf16.mxu0 0
    %522 = vmatpush1.bf16.msra.mxu0 0
    %523 = vmatprep.subr.bf16.mxu0 0
    %524 = vmatpush1.bf16.msra.mxu0 0
    %525 = vmatprep.subr.bf16.mxu0 0
    %526 = vmatpush1.bf16.msra.mxu0 0
    %527 = vmatprep.subr.bf16.mxu0 0
    %528 = vmatpush1.bf16.msra.mxu0 0
    %529 = vmatprep.subr.bf16.mxu0 0
    %530 = vmatpush1.bf16.msra.mxu0 0
    %531 = vmatprep.subr.bf16.mxu0 0
    %532 = vmatpush1.bf16.msra.mxu0 0
    %533 = vmatprep.subr.bf16.mxu0 0
    %534 = vmatpush1.bf16.msra.mxu0 0
    %535 = vmatprep.subr.bf16.mxu0 0
    %536 = vmatpush1.bf16.msra.mxu0 0
    %537 = vmatprep.mubr.bf16.mxu0 0
    %538 = vmatmul.mubr.bf16.gmra.mrb[0].mxu0 %v238
    %v539 = vpop.f32.mrb[0].mxu0
    %v540 = vadd.f32 0.0, %v539
    %v541 = vpop.f32.mrb[0].mxu0
    %v542 = vadd.f32 0.0, %v541
    %v543 = vpop.f32.mrb[0].mxu0
    %v544 = vpop.f32.mrb[0].mxu0
    %545 = vdwg.mxu0
    %v578 = vunpack.c.l.b16 %v240
    %v579 = vunpack.c.h.b16 %v240
    %v580 = vunpack.c.l.b16 %v241
    %v581 = vunpack.c.h.b16 %v241
    %v582 = vunpack.c.l.b16 %v242
    %v583 = vunpack.c.h.b16 %v242
    %v584 = vunpack.c.l.b16 %v243
    %v585 = vunpack.c.h.b16 %v243
    %v586 = vunpack.c.l.b16 %v244
    %v587 = vunpack.c.h.b16 %v244
    %v588 = vunpack.c.l.b16 %v245
    %v589 = vunpack.c.h.b16 %v245
    %v590 = vunpack.c.l.b16 %v246
    %v591 = vunpack.c.h.b16 %v246
    %v592 = vunpack.c.l.b16 %v247
    %v593 = vunpack.c.h.b16 %v247
    %v594 = vunpack.c.l.b16 %v248
    %v595 = vunpack.c.h.b16 %v248
    %v596 = vunpack.c.l.b16 %v249
    %v597 = vunpack.c.h.b16 %v249
    %v598 = vunpack.c.l.b16 %v250
    %v599 = vunpack.c.h.b16 %v250
    %v600 = vunpack.c.l.b16 %v251
    %v601 = vunpack.c.h.b16 %v251
    %v602 = vunpack.c.l.b16 %v252
    %v603 = vunpack.c.h.b16 %v252
    %v604 = vunpack.c.l.b16 %v253
    %v605 = vunpack.c.h.b16 %v253
    %v606 = vunpack.c.l.b16 %v254
    %v607 = vunpack.c.h.b16 %v254
    %v608 = vunpack.c.l.b16 %v255
    %v609 = vunpack.c.h.b16 %v255
    %v610 = vunpack.c.l.b16 %v256
    %v611 = vunpack.c.h.b16 %v256
    %v612 = vunpack.c.l.b16 %v257
    %v613 = vunpack.c.h.b16 %v257
    %v614 = vunpack.c.l.b16 %v258
    %v615 = vunpack.c.h.b16 %v258
    %v616 = vunpack.c.l.b16 %v259
    %v617 = vunpack.c.h.b16 %v259
    %v618 = vunpack.c.l.b16 %v260
    %v619 = vunpack.c.h.b16 %v260
    %v620 = vunpack.c.l.b16 %v261
    %v621 = vunpack.c.h.b16 %v261
    %v622 = vunpack.c.l.b16 %v262
    %v623 = vunpack.c.h.b16 %v262
    %v624 = vunpack.c.l.b16 %v263
    %v625 = vunpack.c.h.b16 %v263
    %v626 = vunpack.c.l.b16 %v264
    %v627 = vunpack.c.h.b16 %v264
    %v628 = vunpack.c.l.b16 %v265
    %v629 = vunpack.c.h.b16 %v265
    %v630 = vunpack.c.l.b16 %v266
    %v631 = vunpack.c.h.b16 %v266
    %v632 = vunpack.c.l.b16 %v267
    %v633 = vunpack.c.h.b16 %v267
    %v634 = vunpack.c.l.b16 %v268
    %v635 = vunpack.c.h.b16 %v268
    %v636 = vunpack.c.l.b16 %v269
    %v637 = vunpack.c.h.b16 %v269
    %v638 = vunpack.c.l.b16 %v270
    %v639 = vunpack.c.h.b16 %v270
    %v640 = vunpack.c.l.b16 %v271
    %v641 = vunpack.c.h.b16 %v271
    %v642 = vpack.c.b16 %v582, %v578
    %v643 = vpack.c.b16 %v583, %v579
    %v644 = vpack.c.b16 %v584, %v580
    %v645 = vpack.c.b16 %v585, %v581
    %v646 = vpack.c.b16 %v590, %v586
    %v647 = vpack.c.b16 %v591, %v587
    %v648 = vpack.c.b16 %v592, %v588
    %v649 = vpack.c.b16 %v593, %v589
    %v650 = vpack.c.b16 %v598, %v594
    %v651 = vpack.c.b16 %v599, %v595
    %v652 = vpack.c.b16 %v600, %v596
    %v653 = vpack.c.b16 %v601, %v597
    %v654 = vpack.c.b16 %v606, %v602
    %v655 = vpack.c.b16 %v607, %v603
    %v656 = vpack.c.b16 %v608, %v604
    %v657 = vpack.c.b16 %v609, %v605
    %v658 = vpack.c.b16 %v614, %v610
    %v659 = vpack.c.b16 %v615, %v611
    %v660 = vpack.c.b16 %v616, %v612
    %v661 = vpack.c.b16 %v617, %v613
    %v662 = vpack.c.b16 %v622, %v618
    %v663 = vpack.c.b16 %v623, %v619
    %v664 = vpack.c.b16 %v624, %v620
    %v665 = vpack.c.b16 %v625, %v621
    %v666 = vpack.c.b16 %v630, %v626
    %v667 = vpack.c.b16 %v631, %v627
    %v668 = vpack.c.b16 %v632, %v628
    %v669 = vpack.c.b16 %v633, %v629
    %v670 = vpack.c.b16 %v638, %v634
    %v671 = vpack.c.b16 %v639, %v635
    %v672 = vpack.c.b16 %v640, %v636
    %v673 = vpack.c.b16 %v641, %v637
    %706 = vmatprep.subr.bf16.mxu0 %v643
    %707 = vmatpush1.bf16.msra.mxu0 %v642
    %708 = vmatprep.subr.bf16.mxu0 %v647
    %709 = vmatpush1.bf16.msra.mxu0 %v646
    %710 = vmatprep.subr.bf16.mxu0 %v651
    %711 = vmatpush1.bf16.msra.mxu0 %v650
    %712 = vmatprep.subr.bf16.mxu0 %v655
    %713 = vmatpush1.bf16.msra.mxu0 %v654
    %714 = vmatprep.subr.bf16.mxu0 %v659
    %715 = vmatpush1.bf16.msra.mxu0 %v658
    %716 = vmatprep.subr.bf16.mxu0 %v663
    %717 = vmatpush1.bf16.msra.mxu0 %v662
    %718 = vmatprep.subr.bf16.mxu0 %v667
    %719 = vmatpush1.bf16.msra.mxu0 %v666
    %720 = vmatprep.subr.bf16.mxu0 %v671
    %721 = vmatpush1.bf16.msra.mxu0 %v670
    %722 = vmatprep.subr.bf16.mxu0 0
    %723 = vmatpush1.bf16.msra.mxu0 0
    %724 = vmatprep.subr.bf16.mxu0 0
    %725 = vmatpush1.bf16.msra.mxu0 0
    %726 = vmatprep.subr.bf16.mxu0 0
    %727 = vmatpush1.bf16.msra.mxu0 0
    %728 = vmatprep.subr.bf16.mxu0 0
    %729 = vmatpush1.bf16.msra.mxu0 0
    %730 = vmatprep.subr.bf16.mxu0 0
    %731 = vmatpush1.bf16.msra.mxu0 0
    %732 = vmatprep.subr.bf16.mxu0 0
    %733 = vmatpush1.bf16.msra.mxu0 0
    %734 = vmatprep.subr.bf16.mxu0 0
    %735 = vmatpush1.bf16.msra.mxu0 0
    %736 = vmatprep.subr.bf16.mxu0 0
    %737 = vmatpush1.bf16.msra.mxu0 0
    %738 = vmatprep.mubr.bf16.mxu0 0
    %739 = vmatmul.mubr.bf16.gmra.mrb[0].mxu0 %v237
    %v740 = vpop.f32.mrb[0].mxu0
    %v741 = vadd.f32 %v499, %v740
    %v742 = vpop.f32.mrb[0].mxu0
    %v743 = vadd.f32 %v501, %v742
    %v744 = vpop.f32.mrb[0].mxu0
    %v745 = vpop.f32.mrb[0].mxu0
    %746 = vdwg.mxu0
    %747 = vmatprep.subr.bf16.mxu0 %v645
    %748 = vmatpush1.bf16.msra.mxu0 %v644
    %749 = vmatprep.subr.bf16.mxu0 %v649
    %750 = vmatpush1.bf16.msra.mxu0 %v648
    %751 = vmatprep.subr.bf16.mxu0 %v653
    %752 = vmatpush1.bf16.msra.mxu0 %v652
    %753 = vmatprep.subr.bf16.mxu0 %v657
    %754 = vmatpush1.bf16.msra.mxu0 %v656
    %755 = vmatprep.subr.bf16.mxu0 %v661
    %756 = vmatpush1.bf16.msra.mxu0 %v660
    %757 = vmatprep.subr.bf16.mxu0 %v665
    %758 = vmatpush1.bf16.msra.mxu0 %v664
    %759 = vmatprep.subr.bf16.mxu0 %v669
    %760 = vmatpush1.bf16.msra.mxu0 %v668
    %761 = vmatprep.subr.bf16.mxu0 %v673
    %762 = vmatpush1.bf16.msra.mxu0 %v672
    %763 = vmatprep.subr.bf16.mxu0 0
    %764 = vmatpush1.bf16.msra.mxu0 0
    %765 = vmatprep.subr.bf16.mxu0 0
    %766 = vmatpush1.bf16.msra.mxu0 0
    %767 = vmatprep.subr.bf16.mxu0 0
    %768 = vmatpush1.bf16.msra.mxu0 0
    %769 = vmatprep.subr.bf16.mxu0 0
    %770 = vmatpush1.bf16.msra.mxu0 0
    %771 = vmatprep.subr.bf16.mxu0 0
    %772 = vmatpush1.bf16.msra.mxu0 0
    %773 = vmatprep.subr.bf16.mxu0 0
    %774 = vmatpush1.bf16.msra.mxu0 0
    %775 = vmatprep.subr.bf16.mxu0 0
    %776 = vmatpush1.bf16.msra.mxu0 0
    %777 = vmatprep.subr.bf16.mxu0 0
    %778 = vmatpush1.bf16.msra.mxu0 0
    %779 = vmatprep.mubr.bf16.mxu0 0
    %780 = vmatmul.mubr.bf16.gmra.mrb[0].mxu0 %v237
    %v781 = vpop.f32.mrb[0].mxu0
    %v782 = vadd.f32 %v540, %v781
    %v783 = vpop.f32.mrb[0].mxu0
    %v784 = vadd.f32 %v542, %v783
    %v785 = vpop.f32.mrb[0].mxu0
    %v786 = vpop.f32.mrb[0].mxu0
    %787 = vdwg.mxu0
    %v788 = vld [vmem:[#allocation7] sm:$0xff]
    %v789 = vld [vmem:[#allocation7 + $0x8] sm:$0xff]
    %v790 = vld [vmem:[#allocation7 + $0x10] sm:$0xff]
    %v791 = vld [vmem:[#allocation7 + $0x18] sm:$0xff]
    %v792 = vld [vmem:[#allocation7 + $0x20] sm:$0xff]
    %v793 = vld [vmem:[#allocation7 + $0x28] sm:$0xff]
    %v794 = vld [vmem:[#allocation7 + $0x30] sm:$0xff]
    %v795 = vld [vmem:[#allocation7 + $0x38] sm:$0xff]
    %v796 = vld [vmem:[#allocation7 + $0x40] sm:$0xff]
    %v797 = vld [vmem:[#allocation7 + $0x48] sm:$0xff]
    %v798 = vld [vmem:[#allocation7 + $0x50] sm:$0xff]
    %v799 = vld [vmem:[#allocation7 + $0x58] sm:$0xff]
    %v800 = vld [vmem:[#allocation7 + $0x60] sm:$0xff]
    %v801 = vld [vmem:[#allocation7 + $0x68] sm:$0xff]
    %v802 = vld [vmem:[#allocation7 + $0x70] sm:$0xff]
    %v803 = vld [vmem:[#allocation7 + $0x78] sm:$0xff]
    %v820 = vunpack.c.l.b16 %v788
    %v821 = vunpack.c.h.b16 %v788
    %v822 = vunpack.c.l.b16 %v789
    %v823 = vunpack.c.h.b16 %v789
    %v824 = vunpack.c.l.b16 %v790
    %v825 = vunpack.c.h.b16 %v790
    %v826 = vunpack.c.l.b16 %v791
    %v827 = vunpack.c.h.b16 %v791
    %v828 = vunpack.c.l.b16 %v792
    %v829 = vunpack.c.h.b16 %v792
    %v830 = vunpack.c.l.b16 %v793
    %v831 = vunpack.c.h.b16 %v793
    %v832 = vunpack.c.l.b16 %v794
    %v833 = vunpack.c.h.b16 %v794
    %v834 = vunpack.c.l.b16 %v795
    %v835 = vunpack.c.h.b16 %v795
    %v836 = vunpack.c.l.b16 %v796
    %v837 = vunpack.c.h.b16 %v796
    %v838 = vunpack.c.l.b16 %v797
    %v839 = vunpack.c.h.b16 %v797
    %v840 = vunpack.c.l.b16 %v798
    %v841 = vunpack.c.h.b16 %v798
    %v842 = vunpack.c.l.b16 %v799
    %v843 = vunpack.c.h.b16 %v799
    %v844 = vunpack.c.l.b16 %v800
    %v845 = vunpack.c.h.b16 %v800
    %v846 = vunpack.c.l.b16 %v801
    %v847 = vunpack.c.h.b16 %v801
    %v848 = vunpack.c.l.b16 %v802
    %v849 = vunpack.c.h.b16 %v802
    %v850 = vunpack.c.l.b16 %v803
    %v851 = vunpack.c.h.b16 %v803
    %v852 = vpack.c.b16 %v824, %v820
    %v853 = vpack.c.b16 %v825, %v821
    %v854 = vpack.c.b16 %v826, %v822
    %v855 = vpack.c.b16 %v827, %v823
    %v856 = vpack.c.b16 %v832, %v828
    %v857 = vpack.c.b16 %v833, %v829
    %v858 = vpack.c.b16 %v834, %v830
    %v859 = vpack.c.b16 %v835, %v831
    %v860 = vpack.c.b16 %v840, %v836
    %v861 = vpack.c.b16 %v841, %v837
    %v862 = vpack.c.b16 %v842, %v838
    %v863 = vpack.c.b16 %v843, %v839
    %v864 = vpack.c.b16 %v848, %v844
    %v865 = vpack.c.b16 %v849, %v845
    %v866 = vpack.c.b16 %v850, %v846
    %v867 = vpack.c.b16 %v851, %v847
    %vm884 = vcmask 523264
    %v886 = vsel %vm884, %v239, 0
    %888 = vmatprep.subr.bf16.mxu0 %v853
    %889 = vmatpush1.bf16.msra.mxu0 %v852
    %890 = vmatprep.subr.bf16.mxu0 %v857
    %891 = vmatpush1.bf16.msra.mxu0 %v856
    %892 = vmatprep.subr.bf16.mxu0 %v861
    %893 = vmatpush1.bf16.msra.mxu0 %v860
    %894 = vmatprep.subr.bf16.mxu0 %v865
    %895 = vmatpush1.bf16.msra.mxu0 %v864
    %896 = vmatprep.subr.bf16.mxu0 0
    %897 = vmatpush1.bf16.msra.mxu0 0
    %898 = vmatprep.subr.bf16.mxu0 0
    %899 = vmatpush1.bf16.msra.mxu0 0
    %900 = vmatprep.subr.bf16.mxu0 0
    %901 = vmatpush1.bf16.msra.mxu0 0
    %902 = vmatprep.subr.bf16.mxu0 0
    %903 = vmatpush1.bf16.msra.mxu0 0
    %904 = vmatprep.subr.bf16.mxu0 0
    %905 = vmatpush1.bf16.msra.mxu0 0
    %906 = vmatprep.subr.bf16.mxu0 0
    %907 = vmatpush1.bf16.msra.mxu0 0
    %908 = vmatprep.subr.bf16.mxu0 0
    %909 = vmatpush1.bf16.msra.mxu0 0
    %910 = vmatprep.subr.bf16.mxu0 0
    %911 = vmatpush1.bf16.msra.mxu0 0
    %912 = vmatprep.subr.bf16.mxu0 0
    %913 = vmatpush1.bf16.msra.mxu0 0
    %914 = vmatprep.subr.bf16.mxu0 0
    %915 = vmatpush1.bf16.msra.mxu0 0
    %916 = vmatprep.subr.bf16.mxu0 0
    %917 = vmatpush1.bf16.msra.mxu0 0
    %918 = vmatprep.subr.bf16.mxu0 0
    %919 = vmatpush1.bf16.msra.mxu0 0
    %920 = vmatprep.mubr.bf16.mxu0 0
    %921 = vmatmul.mubr.bf16.gmra.mrb[0].mxu0 %v886
    %v922 = vpop.f32.mrb[0].mxu0
    %v923 = vadd.f32 0.0, %v922
    %v924 = vpop.f32.mrb[0].mxu0
    %v925 = vadd.f32 0.0, %v924
    %v926 = vpop.f32.mrb[0].mxu0
    %v927 = vpop.f32.mrb[0].mxu0
    %928 = vdwg.mxu0
    %929 = vmatprep.subr.bf16.mxu0 %v855
    %930 = vmatpush1.bf16.msra.mxu0 %v854
    %931 = vmatprep.subr.bf16.mxu0 %v859
    %932 = vmatpush1.bf16.msra.mxu0 %v858
    %933 = vmatprep.subr.bf16.mxu0 %v863
    %934 = vmatpush1.bf16.msra.mxu0 %v862
    %935 = vmatprep.subr.bf16.mxu0 %v867
    %936 = vmatpush1.bf16.msra.mxu0 %v866
    %937 = vmatprep.subr.bf16.mxu0 0
    %938 = vmatpush1.bf16.msra.mxu0 0
    %939 = vmatprep.subr.bf16.mxu0 0
    %940 = vmatpush1.bf16.msra.mxu0 0
    %941 = vmatprep.subr.bf16.mxu0 0
    %942 = vmatpush1.bf16.msra.mxu0 0
    %943 = vmatprep.subr.bf16.mxu0 0
    %944 = vmatpush1.bf16.msra.mxu0 0
    %945 = vmatprep.subr.bf16.mxu0 0
    %946 = vmatpush1.bf16.msra.mxu0 0
    %947 = vmatprep.subr.bf16.mxu0 0
    %948 = vmatpush1.bf16.msra.mxu0 0
    %949 = vmatprep.subr.bf16.mxu0 0
    %950 = vmatpush1.bf16.msra.mxu0 0
    %951 = vmatprep.subr.bf16.mxu0 0
    %952 = vmatpush1.bf16.msra.mxu0 0
    %953 = vmatprep.subr.bf16.mxu0 0
    %954 = vmatpush1.bf16.msra.mxu0 0
    %955 = vmatprep.subr.bf16.mxu0 0
    %956 = vmatpush1.bf16.msra.mxu0 0
    %957 = vmatprep.subr.bf16.mxu0 0
    %958 = vmatpush1.bf16.msra.mxu0 0
    %959 = vmatprep.subr.bf16.mxu0 0
    %960 = vmatpush1.bf16.msra.mxu0 0
    %961 = vmatprep.mubr.bf16.mxu0 0
    %962 = vmatmul.mubr.bf16.gmra.mrb[0].mxu0 %v886
    %v963 = vpop.f32.mrb[0].mxu0
    %v964 = vadd.f32 0.0, %v963
    %v965 = vpop.f32.mrb[0].mxu0
    %v966 = vadd.f32 0.0, %v965
    %v967 = vpop.f32.mrb[0].mxu0
    %v968 = vpop.f32.mrb[0].mxu0
    %969 = vdwg.mxu0
    %v970 = vadd.f32 %v741, %v923
    %v971 = vadd.f32 %v743, %v925
    %v972 = vadd.f32 %v782, %v964
    %v973 = vadd.f32 %v784, %v966
    %v974 = vld [vmem:[#allocation8] sm:$0xf]
    %v976 = vlaneseq
    %v977 = vshrl.u32 %v976, 7
    %v978 = vsub.s32 0, %v977
    %v979 = vrot.slane %v974, %v978
    %v980 = vlaneseq
    %v981 = vshrl.u32 %v980, 7
    %v982 = vsub.s32 1, %v981
    %v983 = vrot.slane %v974, %v982
    %v984 = vlaneseq
    %v985 = vshrl.u32 %v984, 7
    %v986 = vsub.s32 2, %v985
    %v987 = vrot.slane %v974, %v986
    %v988 = vlaneseq
    %v989 = vshrl.u32 %v988, 7
    %v990 = vsub.s32 3, %v989
    %v991 = vrot.slane %v974, %v990
    %v996 = vadd.f32 %v970, %v979
    %v997 = vadd.f32 %v971, %v983
    %v998 = vadd.f32 %v972, %v987
    %v999 = vadd.f32 %v973, %v991
    %v1000 = vld [vmem:[#allocation10] sm:$0xf]
    %v1001 = vld [vmem:[#allocation11] sm:$0xf]
    %v1002 = vadd.f32 %v996, %v997
    %v1003 = vadd.f32 %v1002, %v998
    %v1004 = vadd.f32 %v1003, %v999
    %1005 = vadd.xlane.f32.xlu0 %v1004
    %v1006 = vpop.xlane.xlu0 %1005
    %v1007 = vrcp.pop 512.0
    %v1008 = vmul.f32 %v1006, %v1007
    %v1009 = vmul.f32 %v996, %v996
    %v1010 = vmul.f32 %v997, %v997
    %v1011 = vmul.f32 %v998, %v998
    %v1012 = vmul.f32 %v999, %v999
    %v1013 = vadd.f32 %v1009, %v1010
    %v1014 = vadd.f32 %v1013, %v1011
    %v1015 = vadd.f32 %v1014, %v1012
    %1016 = vadd.xlane.f32.xlu0 %v1015
    %v1017 = vpop.xlane.xlu0 %1016
    %v1018 = vmul.f32 %v1017, %v1007
    %v1019 = vmul.f32 %v1008, %v1008
    %v1020 = vsub.f32 %v1018, %v1019
    %v1021 = vmax.f32 %v1020, 0.0
    %v1022 = vsub.f32 %v996, %v1008
    %v1023 = vsub.f32 %v997, %v1008
    %v1024 = vsub.f32 %v998, %v1008
    %v1025 = vsub.f32 %v999, %v1008
    %v1026 = vadd.f32 %v1021, 1e-05
    %v1027 = vrsqrt.pop %v1026
    %v1028 = vmul.f32 %v1022, %v1027
    %v1029 = vmul.f32 %v1023, %v1027
    %v1030 = vmul.f32 %v1024, %v1027
    %v1031 = vmul.f32 %v1025, %v1027
    %v1033 = vlaneseq
    %v1034 = vshrl.u32 %v1033, 7
    %v1035 = vsub.s32 0, %v1034
    %v1036 = vrot.slane %v1000, %v1035
    %v1037 = vlaneseq
    %v1038 = vshrl.u32 %v1037, 7
    %v1039 = vsub.s32 1, %v1038
    %v1040 = vrot.slane %v1000, %v1039
    %v1041 = vlaneseq
    %v1042 = vshrl.u32 %v1041, 7
    %v1043 = vsub.s32 2, %v1042
    %v1044 = vrot.slane %v1000, %v1043
    %v1045 = vlaneseq
    %v1046 = vshrl.u32 %v1045, 7
    %v1047 = vsub.s32 3, %v1046
    %v1048 = vrot.slane %v1000, %v1047
    %v1053 = vmul.f32 %v1028, %v1036
    %v1054 = vmul.f32 %v1029, %v1040
    %v1055 = vmul.f32 %v1030, %v1044
    %v1056 = vmul.f32 %v1031, %v1048
    %v1058 = vlaneseq
    %v1059 = vshrl.u32 %v1058, 7
    %v1060 = vsub.s32 0, %v1059
    %v1061 = vrot.slane %v1001, %v1060
    %v1062 = vlaneseq
    %v1063 = vshrl.u32 %v1062, 7
    %v1064 = vsub.s32 1, %v1063
    %v1065 = vrot.slane %v1001, %v1064
    %v1066 = vlaneseq
    %v1067 = vshrl.u32 %v1066, 7
    %v1068 = vsub.s32 2, %v1067
    %v1069 = vrot.slane %v1001, %v1068
    %v1070 = vlaneseq
    %v1071 = vshrl.u32 %v1070, 7
    %v1072 = vsub.s32 3, %v1071
    %v1073 = vrot.slane %v1001, %v1072
    %v1078 = vadd.f32 %v1053, %v1061
    %v1079 = vadd.f32 %v1054, %v1065
    %v1080 = vadd.f32 %v1055, %v1069
    %v1081 = vadd.f32 %v1056, %v1073
    %vm1082 = vcmp.gt.f32.partialorder %v1078, 0.0
    %vm1083 = vcmp.gt.f32.partialorder %v1079, 0.0
    %vm1084 = vcmp.gt.f32.partialorder %v1080, 0.0
    %vm1085 = vcmp.gt.f32.partialorder %v1081, 0.0
    %v1086 = vmul.f32 %v1078, 0.2
    %v1087 = vmul.f32 %v1079, 0.2
    %v1088 = vmul.f32 %v1080, 0.2
    %v1089 = vmul.f32 %v1081, 0.2
    %v1090 = vsel %vm1082, %v1078, %v1086
    %v1091 = vsel %vm1083, %v1079, %v1087
    %v1092 = vsel %vm1084, %v1080, %v1088
    %v1093 = vsel %vm1085, %v1081, %v1089
    %v1094 = vpack.c.bf16 %v1090, %v1090
    %v1095 = vpack.c.bf16 %v1091, %v1091
    %v1096 = vpack.c.bf16 %v1092, %v1092
    %v1097 = vpack.c.bf16 %v1093, %v1093
    %v1098 = vld [vmem:[#allocation13] sm:$0xff]
    %v1099 = vld [vmem:[#allocation13 + $0x8] sm:$0xff]
    %v1100 = vld [vmem:[#allocation13 + $0x10] sm:$0xff]
    %v1101 = vld [vmem:[#allocation13 + $0x18] sm:$0xff]
    %v1102 = vld [vmem:[#allocation13 + $0x20] sm:$0xff]
    %v1103 = vld [vmem:[#allocation13 + $0x28] sm:$0xff]
    %v1104 = vld [vmem:[#allocation13 + $0x30] sm:$0xff]
    %v1105 = vld [vmem:[#allocation13 + $0x38] sm:$0xff]
    %v1106 = vld [vmem:[#allocation13 + $0x40] sm:$0xff]
    %v1107 = vld [vmem:[#allocation13 + $0x48] sm:$0xff]
    %v1108 = vld [vmem:[#allocation13 + $0x50] sm:$0xff]
    %v1109 = vld [vmem:[#allocation13 + $0x58] sm:$0xff]
    %v1110 = vld [vmem:[#allocation13 + $0x60] sm:$0xff]
    %v1111 = vld [vmem:[#allocation13 + $0x68] sm:$0xff]
    %v1112 = vld [vmem:[#allocation13 + $0x70] sm:$0xff]
    %v1113 = vld [vmem:[#allocation13 + $0x78] sm:$0xff]
    %v1114 = vld [vmem:[#allocation13 + $0x80] sm:$0xff]
    %v1115 = vld [vmem:[#allocation13 + $0x88] sm:$0xff]
    %v1116 = vld [vmem:[#allocation13 + $0x90] sm:$0xff]
    %v1117 = vld [vmem:[#allocation13 + $0x98] sm:$0xff]
    %v1118 = vld [vmem:[#allocation13 + $0xa0] sm:$0xff]
    %v1119 = vld [vmem:[#allocation13 + $0xa8] sm:$0xff]
    %v1120 = vld [vmem:[#allocation13 + $0xb0] sm:$0xff]
    %v1121 = vld [vmem:[#allocation13 + $0xb8] sm:$0xff]
    %v1122 = vld [vmem:[#allocation13 + $0xc0] sm:$0xff]
    %v1123 = vld [vmem:[#allocation13 + $0xc8] sm:$0xff]
    %v1124 = vld [vmem:[#allocation13 + $0xd0] sm:$0xff]
    %v1125 = vld [vmem:[#allocation13 + $0xd8] sm:$0xff]
    %v1126 = vld [vmem:[#allocation13 + $0xe0] sm:$0xff]
    %v1127 = vld [vmem:[#allocation13 + $0xe8] sm:$0xff]
    %v1128 = vld [vmem:[#allocation13 + $0xf0] sm:$0xff]
    %v1129 = vld [vmem:[#allocation13 + $0xf8] sm:$0xff]
    %v1130 = vld [vmem:[#allocation13 + $0x100] sm:$0xff]
    %v1131 = vld [vmem:[#allocation13 + $0x108] sm:$0xff]
    %v1132 = vld [vmem:[#allocation13 + $0x110] sm:$0xff]
    %v1133 = vld [vmem:[#allocation13 + $0x118] sm:$0xff]
    %v1134 = vld [vmem:[#allocation13 + $0x120] sm:$0xff]
    %v1135 = vld [vmem:[#allocation13 + $0x128] sm:$0xff]
    %v1136 = vld [vmem:[#allocation13 + $0x130] sm:$0xff]
    %v1137 = vld [vmem:[#allocation13 + $0x138] sm:$0xff]
    %v1138 = vld [vmem:[#allocation13 + $0x140] sm:$0xff]
    %v1139 = vld [vmem:[#allocation13 + $0x148] sm:$0xff]
    %v1140 = vld [vmem:[#allocation13 + $0x150] sm:$0xff]
    %v1141 = vld [vmem:[#allocation13 + $0x158] sm:$0xff]
    %v1142 = vld [vmem:[#allocation13 + $0x160] sm:$0xff]
    %v1143 = vld [vmem:[#allocation13 + $0x168] sm:$0xff]
    %v1144 = vld [vmem:[#allocation13 + $0x170] sm:$0xff]
    %v1145 = vld [vmem:[#allocation13 + $0x178] sm:$0xff]
    %v1146 = vld [vmem:[#allocation13 + $0x180] sm:$0xff]
    %v1147 = vld [vmem:[#allocation13 + $0x188] sm:$0xff]
    %v1148 = vld [vmem:[#allocation13 + $0x190] sm:$0xff]
    %v1149 = vld [vmem:[#allocation13 + $0x198] sm:$0xff]
    %v1150 = vld [vmem:[#allocation13 + $0x1a0] sm:$0xff]
    %v1151 = vld [vmem:[#allocation13 + $0x1a8] sm:$0xff]
    %v1152 = vld [vmem:[#allocation13 + $0x1b0] sm:$0xff]
    %v1153 = vld [vmem:[#allocation13 + $0x1b8] sm:$0xff]
    %v1154 = vld [vmem:[#allocation13 + $0x1c0] sm:$0xff]
    %v1155 = vld [vmem:[#allocation13 + $0x1c8] sm:$0xff]
    %v1156 = vld [vmem:[#allocation13 + $0x1d0] sm:$0xff]
    %v1157 = vld [vmem:[#allocation13 + $0x1d8] sm:$0xff]
    %v1158 = vld [vmem:[#allocation13 + $0x1e0] sm:$0xff]
    %v1159 = vld [vmem:[#allocation13 + $0x1e8] sm:$0xff]
    %v1160 = vld [vmem:[#allocation13 + $0x1f0] sm:$0xff]
    %v1161 = vld [vmem:[#allocation13 + $0x1f8] sm:$0xff]
    %v1162 = vld [vmem:[#allocation13 + $0x200] sm:$0xff]
    %v1163 = vld [vmem:[#allocation13 + $0x208] sm:$0xff]
    %v1164 = vld [vmem:[#allocation13 + $0x210] sm:$0xff]
    %v1165 = vld [vmem:[#allocation13 + $0x218] sm:$0xff]
    %v1166 = vld [vmem:[#allocation13 + $0x220] sm:$0xff]
    %v1167 = vld [vmem:[#allocation13 + $0x228] sm:$0xff]
    %v1168 = vld [vmem:[#allocation13 + $0x230] sm:$0xff]
    %v1169 = vld [vmem:[#allocation13 + $0x238] sm:$0xff]
    %v1170 = vld [vmem:[#allocation13 + $0x240] sm:$0xff]
    %v1171 = vld [vmem:[#allocation13 + $0x248] sm:$0xff]
    %v1172 = vld [vmem:[#allocation13 + $0x250] sm:$0xff]
    %v1173 = vld [vmem:[#allocation13 + $0x258] sm:$0xff]
    %v1174 = vld [vmem:[#allocation13 + $0x260] sm:$0xff]
    %v1175 = vld [vmem:[#allocation13 + $0x268] sm:$0xff]
    %v1176 = vld [vmem:[#allocation13 + $0x270] sm:$0xff]
    %v1177 = vld [vmem:[#allocation13 + $0x278] sm:$0xff]
    %v1178 = vld [vmem:[#allocation13 + $0x280] sm:$0xff]
    %v1179 = vld [vmem:[#allocation13 + $0x288] sm:$0xff]
    %v1180 = vld [vmem:[#allocation13 + $0x290] sm:$0xff]
    %v1181 = vld [vmem:[#allocation13 + $0x298] sm:$0xff]
    %v1182 = vld [vmem:[#allocation13 + $0x2a0] sm:$0xff]
    %v1183 = vld [vmem:[#allocation13 + $0x2a8] sm:$0xff]
    %v1184 = vld [vmem:[#allocation13 + $0x2b0] sm:$0xff]
    %v1185 = vld [vmem:[#allocation13 + $0x2b8] sm:$0xff]
    %v1186 = vld [vmem:[#allocation13 + $0x2c0] sm:$0xff]
    %v1187 = vld [vmem:[#allocation13 + $0x2c8] sm:$0xff]
    %v1188 = vld [vmem:[#allocation13 + $0x2d0] sm:$0xff]
    %v1189 = vld [vmem:[#allocation13 + $0x2d8] sm:$0xff]
    %v1190 = vld [vmem:[#allocation13 + $0x2e0] sm:$0xff]
    %v1191 = vld [vmem:[#allocation13 + $0x2e8] sm:$0xff]
    %v1192 = vld [vmem:[#allocation13 + $0x2f0] sm:$0xff]
    %v1193 = vld [vmem:[#allocation13 + $0x2f8] sm:$0xff]
    %v1194 = vld [vmem:[#allocation13 + $0x300] sm:$0xff]
    %v1195 = vld [vmem:[#allocation13 + $0x308] sm:$0xff]
    %v1196 = vld [vmem:[#allocation13 + $0x310] sm:$0xff]
    %v1197 = vld [vmem:[#allocation13 + $0x318] sm:$0xff]
    %v1198 = vld [vmem:[#allocation13 + $0x320] sm:$0xff]
    %v1199 = vld [vmem:[#allocation13 + $0x328] sm:$0xff]
    %v1200 = vld [vmem:[#allocation13 + $0x330] sm:$0xff]
    %v1201 = vld [vmem:[#allocation13 + $0x338] sm:$0xff]
    %v1202 = vld [vmem:[#allocation13 + $0x340] sm:$0xff]
    %v1203 = vld [vmem:[#allocation13 + $0x348] sm:$0xff]
    %v1204 = vld [vmem:[#allocation13 + $0x350] sm:$0xff]
    %v1205 = vld [vmem:[#allocation13 + $0x358] sm:$0xff]
    %v1206 = vld [vmem:[#allocation13 + $0x360] sm:$0xff]
    %v1207 = vld [vmem:[#allocation13 + $0x368] sm:$0xff]
    %v1208 = vld [vmem:[#allocation13 + $0x370] sm:$0xff]
    %v1209 = vld [vmem:[#allocation13 + $0x378] sm:$0xff]
    %v1210 = vld [vmem:[#allocation13 + $0x380] sm:$0xff]
    %v1211 = vld [vmem:[#allocation13 + $0x388] sm:$0xff]
    %v1212 = vld [vmem:[#allocation13 + $0x390] sm:$0xff]
    %v1213 = vld [vmem:[#allocation13 + $0x398] sm:$0xff]
    %v1214 = vld [vmem:[#allocation13 + $0x3a0] sm:$0xff]
    %v1215 = vld [vmem:[#allocation13 + $0x3a8] sm:$0xff]
    %v1216 = vld [vmem:[#allocation13 + $0x3b0] sm:$0xff]
    %v1217 = vld [vmem:[#allocation13 + $0x3b8] sm:$0xff]
    %v1218 = vld [vmem:[#allocation13 + $0x3c0] sm:$0xff]
    %v1219 = vld [vmem:[#allocation13 + $0x3c8] sm:$0xff]
    %v1220 = vld [vmem:[#allocation13 + $0x3d0] sm:$0xff]
    %v1221 = vld [vmem:[#allocation13 + $0x3d8] sm:$0xff]
    %v1222 = vld [vmem:[#allocation13 + $0x3e0] sm:$0xff]
    %v1223 = vld [vmem:[#allocation13 + $0x3e8] sm:$0xff]
    %v1224 = vld [vmem:[#allocation13 + $0x3f0] sm:$0xff]
    %v1225 = vld [vmem:[#allocation13 + $0x3f8] sm:$0xff]
    %v1226 = vld [vmem:[#allocation14] sm:$0xf]
    %v1228 = vlaneseq
    %v1229 = vshrl.u32 %v1228, 7
    %v1230 = vsub.s32 0, %v1229
    %v1231 = vrot.slane %v1226, %v1230
    %v1232 = vlaneseq
    %v1233 = vshrl.u32 %v1232, 7
    %v1234 = vsub.s32 1, %v1233
    %v1235 = vrot.slane %v1226, %v1234
    %v1236 = vlaneseq
    %v1237 = vshrl.u32 %v1236, 7
    %v1238 = vsub.s32 2, %v1237
    %v1239 = vrot.slane %v1226, %v1238
    %v1240 = vlaneseq
    %v1241 = vshrl.u32 %v1240, 7
    %v1242 = vsub.s32 3, %v1241
    %v1243 = vrot.slane %v1226, %v1242
    %v1376 = vunpack.c.l.b16 %v1098
    %v1377 = vunpack.c.h.b16 %v1098
    %v1378 = vunpack.c.l.b16 %v1099
    %v1379 = vunpack.c.h.b16 %v1099
    %v1380 = vunpack.c.l.b16 %v1100
    %v1381 = vunpack.c.h.b16 %v1100
    %v1382 = vunpack.c.l.b16 %v1101
    %v1383 = vunpack.c.h.b16 %v1101
    %v1384 = vunpack.c.l.b16 %v1102
    %v1385 = vunpack.c.h.b16 %v1102
    %v1386 = vunpack.c.l.b16 %v1103
    %v1387 = vunpack.c.h.b16 %v1103
    %v1388 = vunpack.c.l.b16 %v1104
    %v1389 = vunpack.c.h.b16 %v1104
    %v1390 = vunpack.c.l.b16 %v1105
    %v1391 = vunpack.c.h.b16 %v1105
    %v1392 = vunpack.c.l.b16 %v1106
    %v1393 = vunpack.c.h.b16 %v1106
    %v1394 = vunpack.c.l.b16 %v1107
    %v1395 = vunpack.c.h.b16 %v1107
    %v1396 = vunpack.c.l.b16 %v1108
    %v1397 = vunpack.c.h.b16 %v1108
    %v1398 = vunpack.c.l.b16 %v1109
    %v1399 = vunpack.c.h.b16 %v1109
    %v1400 = vunpack.c.l.b16 %v1110
    %v1401 = vunpack.c.h.b16 %v1110
    %v1402 = vunpack.c.l.b16 %v1111
    %v1403 = vunpack.c.h.b16 %v1111
    %v1404 = vunpack.c.l.b16 %v1112
    %v1405 = vunpack.c.h.b16 %v1112
    %v1406 = vunpack.c.l.b16 %v1113
    %v1407 = vunpack.c.h.b16 %v1113
    %v1408 = vunpack.c.l.b16 %v1114
    %v1409 = vunpack.c.h.b16 %v1114
    %v1410 = vunpack.c.l.b16 %v1115
    %v1411 = vunpack.c.h.b16 %v1115
    %v1412 = vunpack.c.l.b16 %v1116
    %v1413 = vunpack.c.h.b16 %v1116
    %v1414 = vunpack.c.l.b16 %v1117
    %v1415 = vunpack.c.h.b16 %v1117
    %v1416 = vunpack.c.l.b16 %v1118
    %v1417 = vunpack.c.h.b16 %v1118
    %v1418 = vunpack.c.l.b16 %v1119
    %v1419 = vunpack.c.h.b16 %v1119
    %v1420 = vunpack.c.l.b16 %v1120
    %v1421 = vunpack.c.h.b16 %v1120
    %v1422 = vunpack.c.l.b16 %v1121
    %v1423 = vunpack.c.h.b16 %v1121
    %v1424 = vunpack.c.l.b16 %v1122
    %v1425 = vunpack.c.h.b16 %v1122
    %v1426 = vunpack.c.l.b16 %v1123
    %v1427 = vunpack.c.h.b16 %v1123
    %v1428 = vunpack.c.l.b16 %v1124
    %v1429 = vunpack.c.h.b16 %v1124
    %v1430 = vunpack.c.l.b16 %v1125
    %v1431 = vunpack.c.h.b16 %v1125
    %v1432 = vunpack.c.l.b16 %v1126
    %v1433 = vunpack.c.h.b16 %v1126
    %v1434 = vunpack.c.l.b16 %v1127
    %v1435 = vunpack.c.h.b16 %v1127
    %v1436 = vunpack.c.l.b16 %v1128
    %v1437 = vunpack.c.h.b16 %v1128
    %v1438 = vunpack.c.l.b16 %v1129
    %v1439 = vunpack.c.h.b16 %v1129
    %v1440 = vunpack.c.l.b16 %v1130
    %v1441 = vunpack.c.h.b16 %v1130
    %v1442 = vunpack.c.l.b16 %v1131
    %v1443 = vunpack.c.h.b16 %v1131
    %v1444 = vunpack.c.l.b16 %v1132
    %v1445 = vunpack.c.h.b16 %v1132
    %v1446 = vunpack.c.l.b16 %v1133
    %v1447 = vunpack.c.h.b16 %v1133
    %v1448 = vunpack.c.l.b16 %v1134
    %v1449 = vunpack.c.h.b16 %v1134
    %v1450 = vunpack.c.l.b16 %v1135
    %v1451 = vunpack.c.h.b16 %v1135
    %v1452 = vunpack.c.l.b16 %v1136
    %v1453 = vunpack.c.h.b16 %v1136
    %v1454 = vunpack.c.l.b16 %v1137
    %v1455 = vunpack.c.h.b16 %v1137
    %v1456 = vunpack.c.l.b16 %v1138
    %v1457 = vunpack.c.h.b16 %v1138
    %v1458 = vunpack.c.l.b16 %v1139
    %v1459 = vunpack.c.h.b16 %v1139
    %v1460 = vunpack.c.l.b16 %v1140
    %v1461 = vunpack.c.h.b16 %v1140
    %v1462 = vunpack.c.l.b16 %v1141
    %v1463 = vunpack.c.h.b16 %v1141
    %v1464 = vunpack.c.l.b16 %v1142
    %v1465 = vunpack.c.h.b16 %v1142
    %v1466 = vunpack.c.l.b16 %v1143
    %v1467 = vunpack.c.h.b16 %v1143
    %v1468 = vunpack.c.l.b16 %v1144
    %v1469 = vunpack.c.h.b16 %v1144
    %v1470 = vunpack.c.l.b16 %v1145
    %v1471 = vunpack.c.h.b16 %v1145
    %v1472 = vunpack.c.l.b16 %v1146
    %v1473 = vunpack.c.h.b16 %v1146
    %v1474 = vunpack.c.l.b16 %v1147
    %v1475 = vunpack.c.h.b16 %v1147
    %v1476 = vunpack.c.l.b16 %v1148
    %v1477 = vunpack.c.h.b16 %v1148
    %v1478 = vunpack.c.l.b16 %v1149
    %v1479 = vunpack.c.h.b16 %v1149
    %v1480 = vunpack.c.l.b16 %v1150
    %v1481 = vunpack.c.h.b16 %v1150
    %v1482 = vunpack.c.l.b16 %v1151
    %v1483 = vunpack.c.h.b16 %v1151
    %v1484 = vunpack.c.l.b16 %v1152
    %v1485 = vunpack.c.h.b16 %v1152
    %v1486 = vunpack.c.l.b16 %v1153
    %v1487 = vunpack.c.h.b16 %v1153
    %v1488 = vunpack.c.l.b16 %v1154
    %v1489 = vunpack.c.h.b16 %v1154
    %v1490 = vunpack.c.l.b16 %v1155
    %v1491 = vunpack.c.h.b16 %v1155
    %v1492 = vunpack.c.l.b16 %v1156
    %v1493 = vunpack.c.h.b16 %v1156
    %v1494 = vunpack.c.l.b16 %v1157
    %v1495 = vunpack.c.h.b16 %v1157
    %v1496 = vunpack.c.l.b16 %v1158
    %v1497 = vunpack.c.h.b16 %v1158
    %v1498 = vunpack.c.l.b16 %v1159
    %v1499 = vunpack.c.h.b16 %v1159
    %v1500 = vunpack.c.l.b16 %v1160
    %v1501 = vunpack.c.h.b16 %v1160
    %v1502 = vunpack.c.l.b16 %v1161
    %v1503 = vunpack.c.h.b16 %v1161
    %v1504 = vunpack.c.l.b16 %v1162
    %v1505 = vunpack.c.h.b16 %v1162
    %v1506 = vunpack.c.l.b16 %v1163
    %v1507 = vunpack.c.h.b16 %v1163
    %v1508 = vunpack.c.l.b16 %v1164
    %v1509 = vunpack.c.h.b16 %v1164
    %v1510 = vunpack.c.l.b16 %v1165
    %v1511 = vunpack.c.h.b16 %v1165
    %v1512 = vunpack.c.l.b16 %v1166
    %v1513 = vunpack.c.h.b16 %v1166
    %v1514 = vunpack.c.l.b16 %v1167
    %v1515 = vunpack.c.h.b16 %v1167
    %v1516 = vunpack.c.l.b16 %v1168
    %v1517 = vunpack.c.h.b16 %v1168
    %v1518 = vunpack.c.l.b16 %v1169
    %v1519 = vunpack.c.h.b16 %v1169
    %v1520 = vunpack.c.l.b16 %v1170
    %v1521 = vunpack.c.h.b16 %v1170
    %v1522 = vunpack.c.l.b16 %v1171
    %v1523 = vunpack.c.h.b16 %v1171
    %v1524 = vunpack.c.l.b16 %v1172
    %v1525 = vunpack.c.h.b16 %v1172
    %v1526 = vunpack.c.l.b16 %v1173
    %v1527 = vunpack.c.h.b16 %v1173
    %v1528 = vunpack.c.l.b16 %v1174
    %v1529 = vunpack.c.h.b16 %v1174
    %v1530 = vunpack.c.l.b16 %v1175
    %v1531 = vunpack.c.h.b16 %v1175
    %v1532 = vunpack.c.l.b16 %v1176
    %v1533 = vunpack.c.h.b16 %v1176
    %v1534 = vunpack.c.l.b16 %v1177
    %v1535 = vunpack.c.h.b16 %v1177
    %v1536 = vunpack.c.l.b16 %v1178
    %v1537 = vunpack.c.h.b16 %v1178
    %v1538 = vunpack.c.l.b16 %v1179
    %v1539 = vunpack.c.h.b16 %v1179
    %v1540 = vunpack.c.l.b16 %v1180
    %v1541 = vunpack.c.h.b16 %v1180
    %v1542 = vunpack.c.l.b16 %v1181
    %v1543 = vunpack.c.h.b16 %v1181
    %v1544 = vunpack.c.l.b16 %v1182
    %v1545 = vunpack.c.h.b16 %v1182
    %v1546 = vunpack.c.l.b16 %v1183
    %v1547 = vunpack.c.h.b16 %v1183
    %v1548 = vunpack.c.l.b16 %v1184
    %v1549 = vunpack.c.h.b16 %v1184
    %v1550 = vunpack.c.l.b16 %v1185
    %v1551 = vunpack.c.h.b16 %v1185
    %v1552 = vunpack.c.l.b16 %v1186
    %v1553 = vunpack.c.h.b16 %v1186
    %v1554 = vunpack.c.l.b16 %v1187
    %v1555 = vunpack.c.h.b16 %v1187
    %v1556 = vunpack.c.l.b16 %v1188
    %v1557 = vunpack.c.h.b16 %v1188
    %v1558 = vunpack.c.l.b16 %v1189
    %v1559 = vunpack.c.h.b16 %v1189
    %v1560 = vunpack.c.l.b16 %v1190
    %v1561 = vunpack.c.h.b16 %v1190
    %v1562 = vunpack.c.l.b16 %v1191
    %v1563 = vunpack.c.h.b16 %v1191
    %v1564 = vunpack.c.l.b16 %v1192
    %v1565 = vunpack.c.h.b16 %v1192
    %v1566 = vunpack.c.l.b16 %v1193
    %v1567 = vunpack.c.h.b16 %v1193
    %v1568 = vunpack.c.l.b16 %v1194
    %v1569 = vunpack.c.h.b16 %v1194
    %v1570 = vunpack.c.l.b16 %v1195
    %v1571 = vunpack.c.h.b16 %v1195
    %v1572 = vunpack.c.l.b16 %v1196
    %v1573 = vunpack.c.h.b16 %v1196
    %v1574 = vunpack.c.l.b16 %v1197
    %v1575 = vunpack.c.h.b16 %v1197
    %v1576 = vunpack.c.l.b16 %v1198
    %v1577 = vunpack.c.h.b16 %v1198
    %v1578 = vunpack.c.l.b16 %v1199
    %v1579 = vunpack.c.h.b16 %v1199
    %v1580 = vunpack.c.l.b16 %v1200
    %v1581 = vunpack.c.h.b16 %v1200
    %v1582 = vunpack.c.l.b16 %v1201
    %v1583 = vunpack.c.h.b16 %v1201
    %v1584 = vunpack.c.l.b16 %v1202
    %v1585 = vunpack.c.h.b16 %v1202
    %v1586 = vunpack.c.l.b16 %v1203
    %v1587 = vunpack.c.h.b16 %v1203
    %v1588 = vunpack.c.l.b16 %v1204
    %v1589 = vunpack.c.h.b16 %v1204
    %v1590 = vunpack.c.l.b16 %v1205
    %v1591 = vunpack.c.h.b16 %v1205
    %v1592 = vunpack.c.l.b16 %v1206
    %v1593 = vunpack.c.h.b16 %v1206
    %v1594 = vunpack.c.l.b16 %v1207
    %v1595 = vunpack.c.h.b16 %v1207
    %v1596 = vunpack.c.l.b16 %v1208
    %v1597 = vunpack.c.h.b16 %v1208
    %v1598 = vunpack.c.l.b16 %v1209
    %v1599 = vunpack.c.h.b16 %v1209
    %v1600 = vunpack.c.l.b16 %v1210
    %v1601 = vunpack.c.h.b16 %v1210
    %v1602 = vunpack.c.l.b16 %v1211
    %v1603 = vunpack.c.h.b16 %v1211
    %v1604 = vunpack.c.l.b16 %v1212
    %v1605 = vunpack.c.h.b16 %v1212
    %v1606 = vunpack.c.l.b16 %v1213
    %v1607 = vunpack.c.h.b16 %v1213
    %v1608 = vunpack.c.l.b16 %v1214
    %v1609 = vunpack.c.h.b16 %v1214
    %v1610 = vunpack.c.l.b16 %v1215
    %v1611 = vunpack.c.h.b16 %v1215
    %v1612 = vunpack.c.l.b16 %v1216
    %v1613 = vunpack.c.h.b16 %v1216
    %v1614 = vunpack.c.l.b16 %v1217
    %v1615 = vunpack.c.h.b16 %v1217
    %v1616 = vunpack.c.l.b16 %v1218
    %v1617 = vunpack.c.h.b16 %v1218
    %v1618 = vunpack.c.l.b16 %v1219
    %v1619 = vunpack.c.h.b16 %v1219
    %v1620 = vunpack.c.l.b16 %v1220
    %v1621 = vunpack.c.h.b16 %v1220
    %v1622 = vunpack.c.l.b16 %v1221
    %v1623 = vunpack.c.h.b16 %v1221
    %v1624 = vunpack.c.l.b16 %v1222
    %v1625 = vunpack.c.h.b16 %v1222
    %v1626 = vunpack.c.l.b16 %v1223
    %v1627 = vunpack.c.h.b16 %v1223
    %v1628 = vunpack.c.l.b16 %v1224
    %v1629 = vunpack.c.h.b16 %v1224
    %v1630 = vunpack.c.l.b16 %v1225
    %v1631 = vunpack.c.h.b16 %v1225
    %v1632 = vpack.c.b16 %v1380, %v1376
    %v1633 = vpack.c.b16 %v1381, %v1377
    %v1634 = vpack.c.b16 %v1382, %v1378
    %v1635 = vpack.c.b16 %v1383, %v1379
    %v1636 = vpack.c.b16 %v1388, %v1384
    %v1637 = vpack.c.b16 %v1389, %v1385
    %v1638 = vpack.c.b16 %v1390, %v1386
    %v1639 = vpack.c.b16 %v1391, %v1387
    %v1640 = vpack.c.b16 %v1396, %v1392
    %v1641 = vpack.c.b16 %v1397, %v1393
    %v1642 = vpack.c.b16 %v1398, %v1394
    %v1643 = vpack.c.b16 %v1399, %v1395
    %v1644 = vpack.c.b16 %v1404, %v1400
    %v1645 = vpack.c.b16 %v1405, %v1401
    %v1646 = vpack.c.b16 %v1406, %v1402
    %v1647 = vpack.c.b16 %v1407, %v1403
    %v1648 = vpack.c.b16 %v1412, %v1408
    %v1649 = vpack.c.b16 %v1413, %v1409
    %v1650 = vpack.c.b16 %v1414, %v1410
    %v1651 = vpack.c.b16 %v1415, %v1411
    %v1652 = vpack.c.b16 %v1420, %v1416
    %v1653 = vpack.c.b16 %v1421, %v1417
    %v1654 = vpack.c.b16 %v1422, %v1418
    %v1655 = vpack.c.b16 %v1423, %v1419
    %v1656 = vpack.c.b16 %v1428, %v1424
    %v1657 = vpack.c.b16 %v1429, %v1425
    %v1658 = vpack.c.b16 %v1430, %v1426
    %v1659 = vpack.c.b16 %v1431, %v1427
    %v1660 = vpack.c.b16 %v1436, %v1432
    %v1661 = vpack.c.b16 %v1437, %v1433
    %v1662 = vpack.c.b16 %v1438, %v1434
    %v1663 = vpack.c.b16 %v1439, %v1435
    %v1664 = vpack.c.b16 %v1444, %v1440
    %v1665 = vpack.c.b16 %v1445, %v1441
    %v1666 = vpack.c.b16 %v1446, %v1442
    %v1667 = vpack.c.b16 %v1447, %v1443
    %v1668 = vpack.c.b16 %v1452, %v1448
    %v1669 = vpack.c.b16 %v1453, %v1449
    %v1670 = vpack.c.b16 %v1454, %v1450
    %v1671 = vpack.c.b16 %v1455, %v1451
    %v1672 = vpack.c.b16 %v1460, %v1456
    %v1673 = vpack.c.b16 %v1461, %v1457
    %v1674 = vpack.c.b16 %v1462, %v1458
    %v1675 = vpack.c.b16 %v1463, %v1459
    %v1676 = vpack.c.b16 %v1468, %v1464
    %v1677 = vpack.c.b16 %v1469, %v1465
    %v1678 = vpack.c.b16 %v1470, %v1466
    %v1679 = vpack.c.b16 %v1471, %v1467
    %v1680 = vpack.c.b16 %v1476, %v1472
    %v1681 = vpack.c.b16 %v1477, %v1473
    %v1682 = vpack.c.b16 %v1478, %v1474
    %v1683 = vpack.c.b16 %v1479, %v1475
    %v1684 = vpack.c.b16 %v1484, %v1480
    %v1685 = vpack.c.b16 %v1485, %v1481
    %v1686 = vpack.c.b16 %v1486, %v1482
    %v1687 = vpack.c.b16 %v1487, %v1483
    %v1688 = vpack.c.b16 %v1492, %v1488
    %v1689 = vpack.c.b16 %v1493, %v1489
    %v1690 = vpack.c.b16 %v1494, %v1490
    %v1691 = vpack.c.b16 %v1495, %v1491
    %v1692 = vpack.c.b16 %v1500, %v1496
    %v1693 = vpack.c.b16 %v1501, %v1497
    %v1694 = vpack.c.b16 %v1502, %v1498
    %v1695 = vpack.c.b16 %v1503, %v1499
    %v1696 = vpack.c.b16 %v1508, %v1504
    %v1697 = vpack.c.b16 %v1509, %v1505
    %v1698 = vpack.c.b16 %v1510, %v1506
    %v1699 = vpack.c.b16 %v1511, %v1507
    %v1700 = vpack.c.b16 %v1516, %v1512
    %v1701 = vpack.c.b16 %v1517, %v1513
    %v1702 = vpack.c.b16 %v1518, %v1514
    %v1703 = vpack.c.b16 %v1519, %v1515
    %v1704 = vpack.c.b16 %v1524, %v1520
    %v1705 = vpack.c.b16 %v1525, %v1521
    %v1706 = vpack.c.b16 %v1526, %v1522
    %v1707 = vpack.c.b16 %v1527, %v1523
    %v1708 = vpack.c.b16 %v1532, %v1528
    %v1709 = vpack.c.b16 %v1533, %v1529
    %v1710 = vpack.c.b16 %v1534, %v1530
    %v1711 = vpack.c.b16 %v1535, %v1531
    %v1712 = vpack.c.b16 %v1540, %v1536
    %v1713 = vpack.c.b16 %v1541, %v1537
    %v1714 = vpack.c.b16 %v1542, %v1538
    %v1715 = vpack.c.b16 %v1543, %v1539
    %v1716 = vpack.c.b16 %v1548, %v1544
    %v1717 = vpack.c.b16 %v1549, %v1545
    %v1718 = vpack.c.b16 %v1550, %v1546
    %v1719 = vpack.c.b16 %v1551, %v1547
    %v1720 = vpack.c.b16 %v1556, %v1552
    %v1721 = vpack.c.b16 %v1557, %v1553
    %v1722 = vpack.c.b16 %v1558, %v1554
    %v1723 = vpack.c.b16 %v1559, %v1555
    %v1724 = vpack.c.b16 %v1564, %v1560
    %v1725 = vpack.c.b16 %v1565, %v1561
    %v1726 = vpack.c.b16 %v1566, %v1562
    %v1727 = vpack.c.b16 %v1567, %v1563
    %v1728 = vpack.c.b16 %v1572, %v1568
    %v1729 = vpack.c.b16 %v1573, %v1569
    %v1730 = vpack.c.b16 %v1574, %v1570
    %v1731 = vpack.c.b16 %v1575, %v1571
    %v1732 = vpack.c.b16 %v1580, %v1576
    %v1733 = vpack.c.b16 %v1581, %v1577
    %v1734 = vpack.c.b16 %v1582, %v1578
    %v1735 = vpack.c.b16 %v1583, %v1579
    %v1736 = vpack.c.b16 %v1588, %v1584
    %v1737 = vpack.c.b16 %v1589, %v1585
    %v1738 = vpack.c.b16 %v1590, %v1586
    %v1739 = vpack.c.b16 %v1591, %v1587
    %v1740 = vpack.c.b16 %v1596, %v1592
    %v1741 = vpack.c.b16 %v1597, %v1593
    %v1742 = vpack.c.b16 %v1598, %v1594
    %v1743 = vpack.c.b16 %v1599, %v1595
    %v1744 = vpack.c.b16 %v1604, %v1600
    %v1745 = vpack.c.b16 %v1605, %v1601
    %v1746 = vpack.c.b16 %v1606, %v1602
    %v1747 = vpack.c.b16 %v1607, %v1603
    %v1748 = vpack.c.b16 %v1612, %v1608
    %v1749 = vpack.c.b16 %v1613, %v1609
    %v1750 = vpack.c.b16 %v1614, %v1610
    %v1751 = vpack.c.b16 %v1615, %v1611
    %v1752 = vpack.c.b16 %v1620, %v1616
    %v1753 = vpack.c.b16 %v1621, %v1617
    %v1754 = vpack.c.b16 %v1622, %v1618
    %v1755 = vpack.c.b16 %v1623, %v1619
    %v1756 = vpack.c.b16 %v1628, %v1624
    %v1757 = vpack.c.b16 %v1629, %v1625
    %v1758 = vpack.c.b16 %v1630, %v1626
    %v1759 = vpack.c.b16 %v1631, %v1627
    %1888 = vmatprep.subr.bf16.mxu0 %v1633
    %1889 = vmatpush1.bf16.msra.mxu0 %v1632
    %1890 = vmatprep.subr.bf16.mxu0 %v1637
    %1891 = vmatpush1.bf16.msra.mxu0 %v1636
    %1892 = vmatprep.subr.bf16.mxu0 %v1641
    %1893 = vmatpush1.bf16.msra.mxu0 %v1640
    %1894 = vmatprep.subr.bf16.mxu0 %v1645
    %1895 = vmatpush1.bf16.msra.mxu0 %v1644
    %1896 = vmatprep.subr.bf16.mxu0 %v1649
    %1897 = vmatpush1.bf16.msra.mxu0 %v1648
    %1898 = vmatprep.subr.bf16.mxu0 %v1653
    %1899 = vmatpush1.bf16.msra.mxu0 %v1652
    %1900 = vmatprep.subr.bf16.mxu0 %v1657
    %1901 = vmatpush1.bf16.msra.mxu0 %v1656
    %1902 = vmatprep.subr.bf16.mxu0 %v1661
    %1903 = vmatpush1.bf16.msra.mxu0 %v1660
    %1904 = vmatprep.subr.bf16.mxu0 %v1665
    %1905 = vmatpush1.bf16.msra.mxu0 %v1664
    %1906 = vmatprep.subr.bf16.mxu0 %v1669
    %1907 = vmatpush1.bf16.msra.mxu0 %v1668
    %1908 = vmatprep.subr.bf16.mxu0 %v1673
    %1909 = vmatpush1.bf16.msra.mxu0 %v1672
    %1910 = vmatprep.subr.bf16.mxu0 %v1677
    %1911 = vmatpush1.bf16.msra.mxu0 %v1676
    %1912 = vmatprep.subr.bf16.mxu0 %v1681
    %1913 = vmatpush1.bf16.msra.mxu0 %v1680
    %1914 = vmatprep.subr.bf16.mxu0 %v1685
    %1915 = vmatpush1.bf16.msra.mxu0 %v1684
    %1916 = vmatprep.subr.bf16.mxu0 %v1689
    %1917 = vmatpush1.bf16.msra.mxu0 %v1688
    %1918 = vmatprep.subr.bf16.mxu0 %v1693
    %1919 = vmatpush1.bf16.msra.mxu0 %v1692
    %1920 = vmatprep.mubr.bf16.mxu0 %v1095
    %1921 = vmatmul.mubr.bf16.gmra.mrb[0].mxu0 %v1094
    %v1922 = vpop.f32.mrb[0].mxu0
    %v1923 = vadd.f32 %v1231, %v1922
    %v1924 = vpop.f32.mrb[0].mxu0
    %v1925 = vadd.f32 %v1235, %v1924
    %v1926 = vpop.f32.mrb[0].mxu0
    %v1927 = vpop.f32.mrb[0].mxu0
    %1928 = vdwg.mxu0
    %1929 = vmatprep.subr.bf16.mxu0 %v1697
    %1930 = vmatpush1.bf16.msra.mxu0 %v1696
    %1931 = vmatprep.subr.bf16.mxu0 %v1701
    %1932 = vmatpush1.bf16.msra.mxu0 %v1700
    %1933 = vmatprep.subr.bf16.mxu0 %v1705
    %1934 = vmatpush1.bf16.msra.mxu0 %v1704
    %1935 = vmatprep.subr.bf16.mxu0 %v1709
    %1936 = vmatpush1.bf16.msra.mxu0 %v1708
    %1937 = vmatprep.subr.bf16.mxu0 %v1713
    %1938 = vmatpush1.bf16.msra.mxu0 %v1712
    %1939 = vmatprep.subr.bf16.mxu0 %v1717
    %1940 = vmatpush1.bf16.msra.mxu0 %v1716
    %1941 = vmatprep.subr.bf16.mxu0 %v1721
    %1942 = vmatpush1.bf16.msra.mxu0 %v1720
    %1943 = vmatprep.subr.bf16.mxu0 %v1725
    %1944 = vmatpush1.bf16.msra.mxu0 %v1724
    %1945 = vmatprep.subr.bf16.mxu0 %v1729
    %1946 = vmatpush1.bf16.msra.mxu0 %v1728
    %1947 = vmatprep.subr.bf16.mxu0 %v1733
    %1948 = vmatpush1.bf16.msra.mxu0 %v1732
    %1949 = vmatprep.subr.bf16.mxu0 %v1737
    %1950 = vmatpush1.bf16.msra.mxu0 %v1736
    %1951 = vmatprep.subr.bf16.mxu0 %v1741
    %1952 = vmatpush1.bf16.msra.mxu0 %v1740
    %1953 = vmatprep.subr.bf16.mxu0 %v1745
    %1954 = vmatpush1.bf16.msra.mxu0 %v1744
    %1955 = vmatprep.subr.bf16.mxu0 %v1749
    %1956 = vmatpush1.bf16.msra.mxu0 %v1748
    %1957 = vmatprep.subr.bf16.mxu0 %v1753
    %1958 = vmatpush1.bf16.msra.mxu0 %v1752
    %1959 = vmatprep.subr.bf16.mxu0 %v1757
    %1960 = vmatpush1.bf16.msra.mxu0 %v1756
    %1961 = vmatprep.mubr.bf16.mxu0 %v1097
    %1962 = vmatmul.mubr.bf16.gmra.mrb[0].mxu0 %v1096
    %v1963 = vpop.f32.mrb[0].mxu0
    %v1964 = vadd.f32 %v1923, %v1963
    %v1965 = vpop.f32.mrb[0].mxu0
    %v1966 = vadd.f32 %v1925, %v1965
    %v1967 = vpop.f32.mrb[0].mxu0
    %v1968 = vpop.f32.mrb[0].mxu0
    %1969 = vdwg.mxu0
    %1970 = vmatprep.subr.bf16.mxu0 %v1635
    %1971 = vmatpush1.bf16.msra.mxu0 %v1634
    %1972 = vmatprep.subr.bf16.mxu0 %v1639
    %1973 = vmatpush1.bf16.msra.mxu0 %v1638
    %1974 = vmatprep.subr.bf16.mxu0 %v1643
    %1975 = vmatpush1.bf16.msra.mxu0 %v1642
    %1976 = vmatprep.subr.bf16.mxu0 %v1647
    %1977 = vmatpush1.bf16.msra.mxu0 %v1646
    %1978 = vmatprep.subr.bf16.mxu0 %v1651
    %1979 = vmatpush1.bf16.msra.mxu0 %v1650
    %1980 = vmatprep.subr.bf16.mxu0 %v1655
    %1981 = vmatpush1.bf16.msra.mxu0 %v1654
    %1982 = vmatprep.subr.bf16.mxu0 %v1659
    %1983 = vmatpush1.bf16.msra.mxu0 %v1658
    %1984 = vmatprep.subr.bf16.mxu0 %v1663
    %1985 = vmatpush1.bf16.msra.mxu0 %v1662
    %1986 = vmatprep.subr.bf16.mxu0 %v1667
    %1987 = vmatpush1.bf16.msra.mxu0 %v1666
    %1988 = vmatprep.subr.bf16.mxu0 %v1671
    %1989 = vmatpush1.bf16.msra.mxu0 %v1670
    %1990 = vmatprep.subr.bf16.mxu0 %v1675
    %1991 = vmatpush1.bf16.msra.mxu0 %v1674
    %1992 = vmatprep.subr.bf16.mxu0 %v1679
    %1993 = vmatpush1.bf16.msra.mxu0 %v1678
    %1994 = vmatprep.subr.bf16.mxu0 %v1683
    %1995 = vmatpush1.bf16.msra.mxu0 %v1682
    %1996 = vmatprep.subr.bf16.mxu0 %v1687
    %1997 = vmatpush1.bf16.msra.mxu0 %v1686
    %1998 = vmatprep.subr.bf16.mxu0 %v1691
    %1999 = vmatpush1.bf16.msra.mxu0 %v1690
    %2000 = vmatprep.subr.bf16.mxu0 %v1695
    %2001 = vmatpush1.bf16.msra.mxu0 %v1694
    %2002 = vmatprep.mubr.bf16.mxu0 %v1095
    %2003 = vmatmul.mubr.bf16.gmra.mrb[0].mxu0 %v1094
    %v2004 = vpop.f32.mrb[0].mxu0
    %v2005 = vadd.f32 %v1239, %v2004
    %v2006 = vpop.f32.mrb[0].mxu0
    %v2007 = vadd.f32 %v1243, %v2006
    %v2008 = vpop.f32.mrb[0].mxu0
    %v2009 = vpop.f32.mrb[0].mxu0
    %2010 = vdwg.mxu0
    %2011 = vmatprep.subr.bf16.mxu0 %v1699
    %2012 = vmatpush1.bf16.msra.mxu0 %v1698
    %2013 = vmatprep.subr.bf16.mxu0 %v1703
    %2014 = vmatpush1.bf16.msra.mxu0 %v1702
    %2015 = vmatprep.subr.bf16.mxu0 %v1707
    %2016 = vmatpush1.bf16.msra.mxu0 %v1706
    %2017 = vmatprep.subr.bf16.mxu0 %v1711
    %2018 = vmatpush1.bf16.msra.mxu0 %v1710
    %2019 = vmatprep.subr.bf16.mxu0 %v1715
    %2020 = vmatpush1.bf16.msra.mxu0 %v1714
    %2021 = vmatprep.subr.bf16.mxu0 %v1719
    %2022 = vmatpush1.bf16.msra.mxu0 %v1718
    %2023 = vmatprep.subr.bf16.mxu0 %v1723
    %2024 = vmatpush1.bf16.msra.mxu0 %v1722
    %2025 = vmatprep.subr.bf16.mxu0 %v1727
    %2026 = vmatpush1.bf16.msra.mxu0 %v1726
    %2027 = vmatprep.subr.bf16.mxu0 %v1731
    %2028 = vmatpush1.bf16.msra.mxu0 %v1730
    %2029 = vmatprep.subr.bf16.mxu0 %v1735
    %2030 = vmatpush1.bf16.msra.mxu0 %v1734
    %2031 = vmatprep.subr.bf16.mxu0 %v1739
    %2032 = vmatpush1.bf16.msra.mxu0 %v1738
    %2033 = vmatprep.subr.bf16.mxu0 %v1743
    %2034 = vmatpush1.bf16.msra.mxu0 %v1742
    %2035 = vmatprep.subr.bf16.mxu0 %v1747
    %2036 = vmatpush1.bf16.msra.mxu0 %v1746
    %2037 = vmatprep.subr.bf16.mxu0 %v1751
    %2038 = vmatpush1.bf16.msra.mxu0 %v1750
    %2039 = vmatprep.subr.bf16.mxu0 %v1755
    %2040 = vmatpush1.bf16.msra.mxu0 %v1754
    %2041 = vmatprep.subr.bf16.mxu0 %v1759
    %2042 = vmatpush1.bf16.msra.mxu0 %v1758
    %2043 = vmatprep.mubr.bf16.mxu0 %v1097
    %2044 = vmatmul.mubr.bf16.gmra.mrb[0].mxu0 %v1096
    %v2045 = vpop.f32.mrb[0].mxu0
    %v2046 = vadd.f32 %v2005, %v2045
    %v2047 = vpop.f32.mrb[0].mxu0
    %v2048 = vadd.f32 %v2007, %v2047
    %v2049 = vpop.f32.mrb[0].mxu0
    %v2050 = vpop.f32.mrb[0].mxu0
    %2051 = vdwg.mxu0
    %v2052 = vld [vmem:[#allocation16] sm:$0xf]
    %v2053 = vld [vmem:[#allocation17] sm:$0xf]
    %v2054 = vadd.f32 %v1964, %v1966
    %v2055 = vadd.f32 %v2054, %v2046
    %v2056 = vadd.f32 %v2055, %v2048
    %2057 = vadd.xlane.f32.xlu0 %v2056
    %v2058 = vpop.xlane.xlu0 %2057
    %v2059 = vmul.f32 %v2058, %v1007
    %v2060 = vmul.f32 %v1964, %v1964
    %v2061 = vmul.f32 %v1966, %v1966
    %v2062 = vmul.f32 %v2046, %v2046
    %v2063 = vmul.f32 %v2048, %v2048
    %v2064 = vadd.f32 %v2060, %v2061
    %v2065 = vadd.f32 %v2064, %v2062
    %v2066 = vadd.f32 %v2065, %v2063
    %2067 = vadd.xlane.f32.xlu0 %v2066
    %v2068 = vpop.xlane.xlu0 %2067
    %v2069 = vmul.f32 %v2068, %v1007
    %v2070 = vmul.f32 %v2059, %v2059
    %v2071 = vsub.f32 %v2069, %v2070
    %v2072 = vmax.f32 %v2071, 0.0
    %v2073 = vsub.f32 %v1964, %v2059
    %v2074 = vsub.f32 %v1966, %v2059
    %v2075 = vsub.f32 %v2046, %v2059
    %v2076 = vsub.f32 %v2048, %v2059
    %v2077 = vadd.f32 %v2072, 1e-05
    %v2078 = vrsqrt.pop %v2077
    %v2079 = vmul.f32 %v2073, %v2078
    %v2080 = vmul.f32 %v2074, %v2078
    %v2081 = vmul.f32 %v2075, %v2078
    %v2082 = vmul.f32 %v2076, %v2078
    %v2084 = vlaneseq
    %v2085 = vshrl.u32 %v2084, 7
    %v2086 = vsub.s32 0, %v2085
    %v2087 = vrot.slane %v2052, %v2086
    %v2088 = vlaneseq
    %v2089 = vshrl.u32 %v2088, 7
    %v2090 = vsub.s32 1, %v2089
    %v2091 = vrot.slane %v2052, %v2090
    %v2092 = vlaneseq
    %v2093 = vshrl.u32 %v2092, 7
    %v2094 = vsub.s32 2, %v2093
    %v2095 = vrot.slane %v2052, %v2094
    %v2096 = vlaneseq
    %v2097 = vshrl.u32 %v2096, 7
    %v2098 = vsub.s32 3, %v2097
    %v2099 = vrot.slane %v2052, %v2098
    %v2104 = vmul.f32 %v2079, %v2087
    %v2105 = vmul.f32 %v2080, %v2091
    %v2106 = vmul.f32 %v2081, %v2095
    %v2107 = vmul.f32 %v2082, %v2099
    %v2109 = vlaneseq
    %v2110 = vshrl.u32 %v2109, 7
    %v2111 = vsub.s32 0, %v2110
    %v2112 = vrot.slane %v2053, %v2111
    %v2113 = vlaneseq
    %v2114 = vshrl.u32 %v2113, 7
    %v2115 = vsub.s32 1, %v2114
    %v2116 = vrot.slane %v2053, %v2115
    %v2117 = vlaneseq
    %v2118 = vshrl.u32 %v2117, 7
    %v2119 = vsub.s32 2, %v2118
    %v2120 = vrot.slane %v2053, %v2119
    %v2121 = vlaneseq
    %v2122 = vshrl.u32 %v2121, 7
    %v2123 = vsub.s32 3, %v2122
    %v2124 = vrot.slane %v2053, %v2123
    %v2129 = vadd.f32 %v2104, %v2112
    %v2130 = vadd.f32 %v2105, %v2116
    %v2131 = vadd.f32 %v2106, %v2120
    %v2132 = vadd.f32 %v2107, %v2124
    %vm2133 = vcmp.gt.f32.partialorder %v2129, 0.0
    %vm2134 = vcmp.gt.f32.partialorder %v2130, 0.0
    %vm2135 = vcmp.gt.f32.partialorder %v2131, 0.0
    %vm2136 = vcmp.gt.f32.partialorder %v2132, 0.0
    %v2137 = vmul.f32 %v2129, 0.2
    %v2138 = vmul.f32 %v2130, 0.2
    %v2139 = vmul.f32 %v2131, 0.2
    %v2140 = vmul.f32 %v2132, 0.2
    %v2141 = vsel %vm2133, %v2129, %v2137
    %v2142 = vsel %vm2134, %v2130, %v2138
    %v2143 = vsel %vm2135, %v2131, %v2139
    %v2144 = vsel %vm2136, %v2132, %v2140
    %v2145 = vpack.c.bf16 %v2141, %v2141
    %v2146 = vpack.c.bf16 %v2142, %v2142
    %v2147 = vpack.c.bf16 %v2143, %v2143
    %v2148 = vpack.c.bf16 %v2144, %v2144
    %v2149 = vld [vmem:[#allocation19] sm:$0xf]
    %v2150 = vld [vmem:[#allocation19 + $0x4] sm:$0xf]
    %v2151 = vld [vmem:[#allocation19 + $0x8] sm:$0xf]
    %v2152 = vld [vmem:[#allocation19 + $0xc] sm:$0xf]
    %v2153 = vld [vmem:[#allocation19 + $0x10] sm:$0xf]
    %v2154 = vld [vmem:[#allocation19 + $0x14] sm:$0xf]
    %v2155 = vld [vmem:[#allocation19 + $0x18] sm:$0xf]
    %v2156 = vld [vmem:[#allocation19 + $0x1c] sm:$0xf]
    %v2157 = vld [vmem:[#allocation19 + $0x20] sm:$0xf]
    %v2158 = vld [vmem:[#allocation19 + $0x24] sm:$0xf]
    %v2159 = vld [vmem:[#allocation19 + $0x28] sm:$0xf]
    %v2160 = vld [vmem:[#allocation19 + $0x2c] sm:$0xf]
    %v2161 = vld [vmem:[#allocation19 + $0x30] sm:$0xf]
    %v2162 = vld [vmem:[#allocation19 + $0x34] sm:$0xf]
    %v2163 = vld [vmem:[#allocation19 + $0x38] sm:$0xf]
    %v2164 = vld [vmem:[#allocation19 + $0x3c] sm:$0xf]
    %v2165 = vld [vmem:[#allocation19 + $0x40] sm:$0xf]
    %v2166 = vld [vmem:[#allocation19 + $0x44] sm:$0xf]
    %v2167 = vld [vmem:[#allocation19 + $0x48] sm:$0xf]
    %v2168 = vld [vmem:[#allocation19 + $0x4c] sm:$0xf]
    %v2169 = vld [vmem:[#allocation19 + $0x50] sm:$0xf]
    %v2170 = vld [vmem:[#allocation19 + $0x54] sm:$0xf]
    %v2171 = vld [vmem:[#allocation19 + $0x58] sm:$0xf]
    %v2172 = vld [vmem:[#allocation19 + $0x5c] sm:$0xf]
    %v2173 = vld [vmem:[#allocation19 + $0x60] sm:$0xf]
    %v2174 = vld [vmem:[#allocation19 + $0x64] sm:$0xf]
    %v2175 = vld [vmem:[#allocation19 + $0x68] sm:$0xf]
    %v2176 = vld [vmem:[#allocation19 + $0x6c] sm:$0xf]
    %v2177 = vld [vmem:[#allocation19 + $0x70] sm:$0xf]
    %v2178 = vld [vmem:[#allocation19 + $0x74] sm:$0xf]
    %v2179 = vld [vmem:[#allocation19 + $0x78] sm:$0xf]
    %v2180 = vld [vmem:[#allocation19 + $0x7c] sm:$0xf]
    %v2181 = vld [vmem:[#allocation19 + $0x80] sm:$0xf]
    %v2182 = vld [vmem:[#allocation19 + $0x84] sm:$0xf]
    %v2183 = vld [vmem:[#allocation19 + $0x88] sm:$0xf]
    %v2184 = vld [vmem:[#allocation19 + $0x8c] sm:$0xf]
    %v2185 = vld [vmem:[#allocation19 + $0x90] sm:$0xf]
    %v2186 = vld [vmem:[#allocation19 + $0x94] sm:$0xf]
    %v2187 = vld [vmem:[#allocation19 + $0x98] sm:$0xf]
    %v2188 = vld [vmem:[#allocation19 + $0x9c] sm:$0xf]
    %v2189 = vld [vmem:[#allocation19 + $0xa0] sm:$0xf]
    %v2190 = vld [vmem:[#allocation19 + $0xa4] sm:$0xf]
    %v2191 = vld [vmem:[#allocation19 + $0xa8] sm:$0xf]
    %v2192 = vld [vmem:[#allocation19 + $0xac] sm:$0xf]
    %v2193 = vld [vmem:[#allocation19 + $0xb0] sm:$0xf]
    %v2194 = vld [vmem:[#allocation19 + $0xb4] sm:$0xf]
    %v2195 = vld [vmem:[#allocation19 + $0xb8] sm:$0xf]
    %v2196 = vld [vmem:[#allocation19 + $0xbc] sm:$0xf]
    %v2197 = vld [vmem:[#allocation19 + $0xc0] sm:$0xf]
    %v2198 = vld [vmem:[#allocation19 + $0xc4] sm:$0xf]
    %v2199 = vld [vmem:[#allocation19 + $0xc8] sm:$0xf]
    %v2200 = vld [vmem:[#allocation19 + $0xcc] sm:$0xf]
    %v2201 = vld [vmem:[#allocation19 + $0xd0] sm:$0xf]
    %v2202 = vld [vmem:[#allocation19 + $0xd4] sm:$0xf]
    %v2203 = vld [vmem:[#allocation19 + $0xd8] sm:$0xf]
    %v2204 = vld [vmem:[#allocation19 + $0xdc] sm:$0xf]
    %v2205 = vld [vmem:[#allocation19 + $0xe0] sm:$0xf]
    %v2206 = vld [vmem:[#allocation19 + $0xe4] sm:$0xf]
    %v2207 = vld [vmem:[#allocation19 + $0xe8] sm:$0xf]
    %v2208 = vld [vmem:[#allocation19 + $0xec] sm:$0xf]
    %v2209 = vld [vmem:[#allocation19 + $0xf0] sm:$0xf]
    %v2210 = vld [vmem:[#allocation19 + $0xf4] sm:$0xf]
    %v2211 = vld [vmem:[#allocation19 + $0xf8] sm:$0xf]
    %v2212 = vld [vmem:[#allocation19 + $0xfc] sm:$0xf]
    %v2213 = vld [vmem:[%s14] sm:$0xf]
    %v2214 = vld [vmem:[%s14 + $0x4] sm:$0xf]
    %v2215 = vld [vmem:[%s14 + $0x8] sm:$0xf]
    %v2216 = vld [vmem:[%s14 + $0xc] sm:$0xf]
    %v2217 = vld [vmem:[%s14 + $0x10] sm:$0xf]
    %v2218 = vld [vmem:[%s14 + $0x14] sm:$0xf]
    %v2219 = vld [vmem:[%s14 + $0x18] sm:$0xf]
    %v2220 = vld [vmem:[%s14 + $0x1c] sm:$0xf]
    %v2221 = vld [vmem:[%s14 + $0x20] sm:$0xf]
    %v2222 = vld [vmem:[%s14 + $0x24] sm:$0xf]
    %v2223 = vld [vmem:[%s14 + $0x28] sm:$0xf]
    %v2224 = vld [vmem:[%s14 + $0x2c] sm:$0xf]
    %v2225 = vld [vmem:[%s14 + $0x30] sm:$0xf]
    %v2226 = vld [vmem:[%s14 + $0x34] sm:$0xf]
    %v2227 = vld [vmem:[%s14 + $0x38] sm:$0xf]
    %v2228 = vld [vmem:[%s14 + $0x3c] sm:$0xf]
    %v2245 = vunpack.c.l.b16 %v2213
    %v2246 = vunpack.c.l.b16 %v2214
    %v2247 = vunpack.c.l.b16 %v2215
    %v2248 = vunpack.c.l.b16 %v2216
    %v2249 = vunpack.c.l.b16 %v2217
    %v2250 = vunpack.c.l.b16 %v2218
    %v2251 = vunpack.c.l.b16 %v2219
    %v2252 = vunpack.c.l.b16 %v2220
    %v2253 = vunpack.c.l.b16 %v2221
    %v2254 = vunpack.c.l.b16 %v2222
    %v2255 = vunpack.c.l.b16 %v2223
    %v2256 = vunpack.c.l.b16 %v2224
    %v2257 = vunpack.c.l.b16 %v2225
    %v2258 = vunpack.c.l.b16 %v2226
    %v2259 = vunpack.c.l.b16 %v2227
    %v2260 = vunpack.c.l.b16 %v2228
    %v2261 = vpack.c.b16 %v2246, %v2245
    %v2262 = vpack.c.b16 %v2248, %v2247
    %v2263 = vpack.c.b16 %v2250, %v2249
    %v2264 = vpack.c.b16 %v2252, %v2251
    %v2265 = vpack.c.b16 %v2254, %v2253
    %v2266 = vpack.c.b16 %v2256, %v2255
    %v2267 = vpack.c.b16 %v2258, %v2257
    %v2268 = vpack.c.b16 %v2260, %v2259
    %2277 = vmatprep.subr.bf16.mxu0 0
    %2278 = vmatpush1.bf16.msra.mxu0 %v2261
    %2279 = vmatprep.subr.bf16.mxu0 0
    %2280 = vmatpush1.bf16.msra.mxu0 %v2262
    %2281 = vmatprep.subr.bf16.mxu0 0
    %2282 = vmatpush1.bf16.msra.mxu0 %v2263
    %2283 = vmatprep.subr.bf16.mxu0 0
    %2284 = vmatpush1.bf16.msra.mxu0 %v2264
    %2285 = vmatprep.subr.bf16.mxu0 0
    %2286 = vmatpush1.bf16.msra.mxu0 %v2265
    %2287 = vmatprep.subr.bf16.mxu0 0
    %2288 = vmatpush1.bf16.msra.mxu0 %v2266
    %2289 = vmatprep.subr.bf16.mxu0 0
    %2290 = vmatpush1.bf16.msra.mxu0 %v2267
    %2291 = vmatprep.subr.bf16.mxu0 0
    %2292 = vmatpush1.bf16.msra.mxu0 %v2268
    %2293 = vmatprep.subr.bf16.mxu0 0
    %2294 = vmatpush1.bf16.msra.mxu0 0
    %2295 = vmatprep.subr.bf16.mxu0 0
    %2296 = vmatpush1.bf16.msra.mxu0 0
    %2297 = vmatprep.subr.bf16.mxu0 0
    %2298 = vmatpush1.bf16.msra.mxu0 0
    %2299 = vmatprep.subr.bf16.mxu0 0
    %2300 = vmatpush1.bf16.msra.mxu0 0
    %2301 = vmatprep.subr.bf16.mxu0 0
    %2302 = vmatpush1.bf16.msra.mxu0 0
    %2303 = vmatprep.subr.bf16.mxu0 0
    %2304 = vmatpush1.bf16.msra.mxu0 0
    %2305 = vmatprep.subr.bf16.mxu0 0
    %2306 = vmatpush1.bf16.msra.mxu0 0
    %2307 = vmatprep.subr.bf16.mxu0 0
    %2308 = vmatpush1.bf16.msra.mxu0 0
    %2309 = vmatprep.mubr.bf16.mxu0 0
    %2310 = vmatmul.mubr.bf16.gmra.mrb[0].mxu0 %v237
    %v2311 = vpop.f32.mrb[0].mxu0
    %v2312 = vadd.f32 0.0, %v2311
    %v2313 = vpop.f32.mrb[0].mxu0
    %v2314 = vpop.f32.mrb[0].mxu0
    %v2315 = vpop.f32.mrb[0].mxu0
    %2316 = vdwg.mxu0
    %v2381 = vunpack.c.l.b16 %v2149
    %v2382 = vunpack.c.l.b16 %v2150
    %v2383 = vunpack.c.l.b16 %v2151
    %v2384 = vunpack.c.l.b16 %v2152
    %v2385 = vunpack.c.l.b16 %v2153
    %v2386 = vunpack.c.l.b16 %v2154
    %v2387 = vunpack.c.l.b16 %v2155
    %v2388 = vunpack.c.l.b16 %v2156
    %v2389 = vunpack.c.l.b16 %v2157
    %v2390 = vunpack.c.l.b16 %v2158
    %v2391 = vunpack.c.l.b16 %v2159
    %v2392 = vunpack.c.l.b16 %v2160
    %v2393 = vunpack.c.l.b16 %v2161
    %v2394 = vunpack.c.l.b16 %v2162
    %v2395 = vunpack.c.l.b16 %v2163
    %v2396 = vunpack.c.l.b16 %v2164
    %v2397 = vunpack.c.l.b16 %v2165
    %v2398 = vunpack.c.l.b16 %v2166
    %v2399 = vunpack.c.l.b16 %v2167
    %v2400 = vunpack.c.l.b16 %v2168
    %v2401 = vunpack.c.l.b16 %v2169
    %v2402 = vunpack.c.l.b16 %v2170
    %v2403 = vunpack.c.l.b16 %v2171
    %v2404 = vunpack.c.l.b16 %v2172
    %v2405 = vunpack.c.l.b16 %v2173
    %v2406 = vunpack.c.l.b16 %v2174
    %v2407 = vunpack.c.l.b16 %v2175
    %v2408 = vunpack.c.l.b16 %v2176
    %v2409 = vunpack.c.l.b16 %v2177
    %v2410 = vunpack.c.l.b16 %v2178
    %v2411 = vunpack.c.l.b16 %v2179
    %v2412 = vunpack.c.l.b16 %v2180
    %v2413 = vunpack.c.l.b16 %v2181
    %v2414 = vunpack.c.l.b16 %v2182
    %v2415 = vunpack.c.l.b16 %v2183
    %v2416 = vunpack.c.l.b16 %v2184
    %v2417 = vunpack.c.l.b16 %v2185
    %v2418 = vunpack.c.l.b16 %v2186
    %v2419 = vunpack.c.l.b16 %v2187
    %v2420 = vunpack.c.l.b16 %v2188
    %v2421 = vunpack.c.l.b16 %v2189
    %v2422 = vunpack.c.l.b16 %v2190
    %v2423 = vunpack.c.l.b16 %v2191
    %v2424 = vunpack.c.l.b16 %v2192
    %v2425 = vunpack.c.l.b16 %v2193
    %v2426 = vunpack.c.l.b16 %v2194
    %v2427 = vunpack.c.l.b16 %v2195
    %v2428 = vunpack.c.l.b16 %v2196
    %v2429 = vunpack.c.l.b16 %v2197
    %v2430 = vunpack.c.l.b16 %v2198
    %v2431 = vunpack.c.l.b16 %v2199
    %v2432 = vunpack.c.l.b16 %v2200
    %v2433 = vunpack.c.l.b16 %v2201
    %v2434 = vunpack.c.l.b16 %v2202
    %v2435 = vunpack.c.l.b16 %v2203
    %v2436 = vunpack.c.l.b16 %v2204
    %v2437 = vunpack.c.l.b16 %v2205
    %v2438 = vunpack.c.l.b16 %v2206
    %v2439 = vunpack.c.l.b16 %v2207
    %v2440 = vunpack.c.l.b16 %v2208
    %v2441 = vunpack.c.l.b16 %v2209
    %v2442 = vunpack.c.l.b16 %v2210
    %v2443 = vunpack.c.l.b16 %v2211
    %v2444 = vunpack.c.l.b16 %v2212
    %v2445 = vpack.c.b16 %v2382, %v2381
    %v2446 = vpack.c.b16 %v2384, %v2383
    %v2447 = vpack.c.b16 %v2386, %v2385
    %v2448 = vpack.c.b16 %v2388, %v2387
    %v2449 = vpack.c.b16 %v2390, %v2389
    %v2450 = vpack.c.b16 %v2392, %v2391
    %v2451 = vpack.c.b16 %v2394, %v2393
    %v2452 = vpack.c.b16 %v2396, %v2395
    %v2453 = vpack.c.b16 %v2398, %v2397
    %v2454 = vpack.c.b16 %v2400, %v2399
    %v2455 = vpack.c.b16 %v2402, %v2401
    %v2456 = vpack.c.b16 %v2404, %v2403
    %v2457 = vpack.c.b16 %v2406, %v2405
    %v2458 = vpack.c.b16 %v2408, %v2407
    %v2459 = vpack.c.b16 %v2410, %v2409
    %v2460 = vpack.c.b16 %v2412, %v2411
    %v2461 = vpack.c.b16 %v2414, %v2413
    %v2462 = vpack.c.b16 %v2416, %v2415
    %v2463 = vpack.c.b16 %v2418, %v2417
    %v2464 = vpack.c.b16 %v2420, %v2419
    %v2465 = vpack.c.b16 %v2422, %v2421
    %v2466 = vpack.c.b16 %v2424, %v2423
    %v2467 = vpack.c.b16 %v2426, %v2425
    %v2468 = vpack.c.b16 %v2428, %v2427
    %v2469 = vpack.c.b16 %v2430, %v2429
    %v2470 = vpack.c.b16 %v2432, %v2431
    %v2471 = vpack.c.b16 %v2434, %v2433
    %v2472 = vpack.c.b16 %v2436, %v2435
    %v2473 = vpack.c.b16 %v2438, %v2437
    %v2474 = vpack.c.b16 %v2440, %v2439
    %v2475 = vpack.c.b16 %v2442, %v2441
    %v2476 = vpack.c.b16 %v2444, %v2443
    %2509 = vmatprep.subr.bf16.mxu0 0
    %2510 = vmatpush1.bf16.msra.mxu0 %v2445
    %2511 = vmatprep.subr.bf16.mxu0 0
    %2512 = vmatpush1.bf16.msra.mxu0 %v2446
    %2513 = vmatprep.subr.bf16.mxu0 0
    %2514 = vmatpush1.bf16.msra.mxu0 %v2447
    %2515 = vmatprep.subr.bf16.mxu0 0
    %2516 = vmatpush1.bf16.msra.mxu0 %v2448
    %2517 = vmatprep.subr.bf16.mxu0 0
    %2518 = vmatpush1.bf16.msra.mxu0 %v2449
    %2519 = vmatprep.subr.bf16.mxu0 0
    %2520 = vmatpush1.bf16.msra.mxu0 %v2450
    %2521 = vmatprep.subr.bf16.mxu0 0
    %2522 = vmatpush1.bf16.msra.mxu0 %v2451
    %2523 = vmatprep.subr.bf16.mxu0 0
    %2524 = vmatpush1.bf16.msra.mxu0 %v2452
    %2525 = vmatprep.subr.bf16.mxu0 0
    %2526 = vmatpush1.bf16.msra.mxu0 %v2453
    %2527 = vmatprep.subr.bf16.mxu0 0
    %2528 = vmatpush1.bf16.msra.mxu0 %v2454
    %2529 = vmatprep.subr.bf16.mxu0 0
    %2530 = vmatpush1.bf16.msra.mxu0 %v2455
    %2531 = vmatprep.subr.bf16.mxu0 0
    %2532 = vmatpush1.bf16.msra.mxu0 %v2456
    %2533 = vmatprep.subr.bf16.mxu0 0
    %2534 = vmatpush1.bf16.msra.mxu0 %v2457
    %2535 = vmatprep.subr.bf16.mxu0 0
    %2536 = vmatpush1.bf16.msra.mxu0 %v2458
    %2537 = vmatprep.subr.bf16.mxu0 0
    %2538 = vmatpush1.bf16.msra.mxu0 %v2459
    %2539 = vmatprep.subr.bf16.mxu0 0
    %2540 = vmatpush1.bf16.msra.mxu0 %v2460
    %2541 = vmatprep.mubr.bf16.mxu0 %v2146
    %2542 = vmatmul.mubr.bf16.gmra.mrb[0].mxu0 %v2145
    %v2543 = vpop.f32.mrb[0].mxu0
    %v2544 = vadd.f32 %v2312, %v2543
    %v2545 = vpop.f32.mrb[0].mxu0
    %v2546 = vpop.f32.mrb[0].mxu0
    %v2547 = vpop.f32.mrb[0].mxu0
    %2548 = vdwg.mxu0
    %2549 = vmatprep.subr.bf16.mxu0 0
    %2550 = vmatpush1.bf16.msra.mxu0 %v2461
    %2551 = vmatprep.subr.bf16.mxu0 0
    %2552 = vmatpush1.bf16.msra.mxu0 %v2462
    %2553 = vmatprep.subr.bf16.mxu0 0
    %2554 = vmatpush1.bf16.msra.mxu0 %v2463
    %2555 = vmatprep.subr.bf16.mxu0 0
    %2556 = vmatpush1.bf16.msra.mxu0 %v2464
    %2557 = vmatprep.subr.bf16.mxu0 0
    %2558 = vmatpush1.bf16.msra.mxu0 %v2465
    %2559 = vmatprep.subr.bf16.mxu0 0
    %2560 = vmatpush1.bf16.msra.mxu0 %v2466
    %2561 = vmatprep.subr.bf16.mxu0 0
    %2562 = vmatpush1.bf16.msra.mxu0 %v2467
    %2563 = vmatprep.subr.bf16.mxu0 0
    %2564 = vmatpush1.bf16.msra.mxu0 %v2468
    %2565 = vmatprep.subr.bf16.mxu0 0
    %2566 = vmatpush1.bf16.msra.mxu0 %v2469
    %2567 = vmatprep.subr.bf16.mxu0 0
    %2568 = vmatpush1.bf16.msra.mxu0 %v2470
    %2569 = vmatprep.subr.bf16.mxu0 0
    %2570 = vmatpush1.bf16.msra.mxu0 %v2471
    %2571 = vmatprep.subr.bf16.mxu0 0
    %2572 = vmatpush1.bf16.msra.mxu0 %v2472
    %2573 = vmatprep.subr.bf16.mxu0 0
    %2574 = vmatpush1.bf16.msra.mxu0 %v2473
    %2575 = vmatprep.subr.bf16.mxu0 0
    %2576 = vmatpush1.bf16.msra.mxu0 %v2474
    %2577 = vmatprep.subr.bf16.mxu0 0
    %2578 = vmatpush1.bf16.msra.mxu0 %v2475
    %2579 = vmatprep.subr.bf16.mxu0 0
    %2580 = vmatpush1.bf16.msra.mxu0 %v2476
    %2581 = vmatprep.mubr.bf16.mxu0 %v2148
    %2582 = vmatmul.mubr.bf16.gmra.mrb[0].mxu0 %v2147
    %v2583 = vpop.f32.mrb[0].mxu0
    %v2584 = vadd.f32 %v2544, %v2583
    %v2585 = vpop.f32.mrb[0].mxu0
    %v2586 = vpop.f32.mrb[0].mxu0
    %v2587 = vpop.f32.mrb[0].mxu0
    %2588 = vdwg.mxu0
    %v2589 = vld [vmem:[#allocation20] sm:$0xf]
    %v2590 = vld [vmem:[#allocation20 + $0x4] sm:$0xf]
    %v2591 = vld [vmem:[#allocation20 + $0x8] sm:$0xf]
    %v2592 = vld [vmem:[#allocation20 + $0xc] sm:$0xf]
    %v2593 = vld [vmem:[#allocation20 + $0x10] sm:$0xf]
    %v2594 = vld [vmem:[#allocation20 + $0x14] sm:$0xf]
    %v2595 = vld [vmem:[#allocation20 + $0x18] sm:$0xf]
    %v2596 = vld [vmem:[#allocation20 + $0x1c] sm:$0xf]
    %v2597 = vld [vmem:[#allocation20 + $0x20] sm:$0xf]
    %v2598 = vld [vmem:[#allocation20 + $0x24] sm:$0xf]
    %v2599 = vld [vmem:[#allocation20 + $0x28] sm:$0xf]
    %v2600 = vld [vmem:[#allocation20 + $0x2c] sm:$0xf]
    %v2601 = vld [vmem:[#allocation20 + $0x30] sm:$0xf]
    %v2602 = vld [vmem:[#allocation20 + $0x34] sm:$0xf]
    %v2603 = vld [vmem:[#allocation20 + $0x38] sm:$0xf]
    %v2604 = vld [vmem:[#allocation20 + $0x3c] sm:$0xf]
    %v2621 = vunpack.c.l.b16 %v2589
    %v2622 = vunpack.c.l.b16 %v2590
    %v2623 = vunpack.c.l.b16 %v2591
    %v2624 = vunpack.c.l.b16 %v2592
    %v2625 = vunpack.c.l.b16 %v2593
    %v2626 = vunpack.c.l.b16 %v2594
    %v2627 = vunpack.c.l.b16 %v2595
    %v2628 = vunpack.c.l.b16 %v2596
    %v2629 = vunpack.c.l.b16 %v2597
    %v2630 = vunpack.c.l.b16 %v2598
    %v2631 = vunpack.c.l.b16 %v2599
    %v2632 = vunpack.c.l.b16 %v2600
    %v2633 = vunpack.c.l.b16 %v2601
    %v2634 = vunpack.c.l.b16 %v2602
    %v2635 = vunpack.c.l.b16 %v2603
    %v2636 = vunpack.c.l.b16 %v2604
    %v2637 = vpack.c.b16 %v2622, %v2621
    %v2638 = vpack.c.b16 %v2624, %v2623
    %v2639 = vpack.c.b16 %v2626, %v2625
    %v2640 = vpack.c.b16 %v2628, %v2627
    %v2641 = vpack.c.b16 %v2630, %v2629
    %v2642 = vpack.c.b16 %v2632, %v2631
    %v2643 = vpack.c.b16 %v2634, %v2633
    %v2644 = vpack.c.b16 %v2636, %v2635
    %2653 = vmatprep.subr.bf16.mxu0 0
    %2654 = vmatpush1.bf16.msra.mxu0 %v2637
    %2655 = vmatprep.subr.bf16.mxu0 0
    %2656 = vmatpush1.bf16.msra.mxu0 %v2638
    %2657 = vmatprep.subr.bf16.mxu0 0
    %2658 = vmatpush1.bf16.msra.mxu0 %v2639
    %2659 = vmatprep.subr.bf16.mxu0 0
    %2660 = vmatpush1.bf16.msra.mxu0 %v2640
    %2661 = vmatprep.subr.bf16.mxu0 0
    %2662 = vmatpush1.bf16.msra.mxu0 %v2641
    %2663 = vmatprep.subr.bf16.mxu0 0
    %2664 = vmatpush1.bf16.msra.mxu0 %v2642
    %2665 = vmatprep.subr.bf16.mxu0 0
    %2666 = vmatpush1.bf16.msra.mxu0 %v2643
    %2667 = vmatprep.subr.bf16.mxu0 0
    %2668 = vmatpush1.bf16.msra.mxu0 %v2644
    %2669 = vmatprep.subr.bf16.mxu0 0
    %2670 = vmatpush1.bf16.msra.mxu0 0
    %2671 = vmatprep.subr.bf16.mxu0 0
    %2672 = vmatpush1.bf16.msra.mxu0 0
    %2673 = vmatprep.subr.bf16.mxu0 0
    %2674 = vmatpush1.bf16.msra.mxu0 0
    %2675 = vmatprep.subr.bf16.mxu0 0
    %2676 = vmatpush1.bf16.msra.mxu0 0
    %2677 = vmatprep.subr.bf16.mxu0 0
    %2678 = vmatpush1.bf16.msra.mxu0 0
    %2679 = vmatprep.subr.bf16.mxu0 0
    %2680 = vmatpush1.bf16.msra.mxu0 0
    %2681 = vmatprep.subr.bf16.mxu0 0
    %2682 = vmatpush1.bf16.msra.mxu0 0
    %2683 = vmatprep.subr.bf16.mxu0 0
    %2684 = vmatpush1.bf16.msra.mxu0 0
    %2685 = vmatprep.mubr.bf16.mxu0 0
    %2686 = vmatmul.mubr.bf16.gmra.mrb[0].mxu0 %v238
    %v2687 = vpop.f32.mrb[0].mxu0
    %v2688 = vadd.f32 0.0, %v2687
    %v2689 = vpop.f32.mrb[0].mxu0
    %v2690 = vpop.f32.mrb[0].mxu0
    %v2691 = vpop.f32.mrb[0].mxu0
    %2692 = vdwg.mxu0
    %v2693 = vadd.f32 %v2584, %v2688
    %v2694 = vld [vmem:[#allocation22] sm:$0xf]
    %v2695 = vld [vmem:[#allocation22 + $0x4] sm:$0xf]
    %v2696 = vld [vmem:[#allocation22 + $0x8] sm:$0xf]
    %v2697 = vld [vmem:[#allocation22 + $0xc] sm:$0xf]
    %v2698 = vld [vmem:[#allocation22 + $0x10] sm:$0xf]
    %v2699 = vld [vmem:[#allocation22 + $0x14] sm:$0xf]
    %v2700 = vld [vmem:[#allocation22 + $0x18] sm:$0xf]
    %v2701 = vld [vmem:[#allocation22 + $0x1c] sm:$0xf]
    %v2710 = vunpack.c.l.b16 %v2694
    %v2711 = vunpack.c.l.b16 %v2695
    %v2712 = vunpack.c.l.b16 %v2696
    %v2713 = vunpack.c.l.b16 %v2697
    %v2714 = vunpack.c.l.b16 %v2698
    %v2715 = vunpack.c.l.b16 %v2699
    %v2716 = vunpack.c.l.b16 %v2700
    %v2717 = vunpack.c.l.b16 %v2701
    %v2718 = vpack.c.b16 %v2711, %v2710
    %v2719 = vpack.c.b16 %v2713, %v2712
    %v2720 = vpack.c.b16 %v2715, %v2714
    %v2721 = vpack.c.b16 %v2717, %v2716
    %2726 = vmatprep.subr.bf16.mxu0 0
    %2727 = vmatpush1.bf16.msra.mxu0 %v2718
    %2728 = vmatprep.subr.bf16.mxu0 0
    %2729 = vmatpush1.bf16.msra.mxu0 %v2719
    %2730 = vmatprep.subr.bf16.mxu0 0
    %2731 = vmatpush1.bf16.msra.mxu0 %v2720
    %2732 = vmatprep.subr.bf16.mxu0 0
    %2733 = vmatpush1.bf16.msra.mxu0 %v2721
    %2734 = vmatprep.subr.bf16.mxu0 0
    %2735 = vmatpush1.bf16.msra.mxu0 0
    %2736 = vmatprep.subr.bf16.mxu0 0
    %2737 = vmatpush1.bf16.msra.mxu0 0
    %2738 = vmatprep.subr.bf16.mxu0 0
    %2739 = vmatpush1.bf16.msra.mxu0 0
    %2740 = vmatprep.subr.bf16.mxu0 0
    %2741 = vmatpush1.bf16.msra.mxu0 0
    %2742 = vmatprep.subr.bf16.mxu0 0
    %2743 = vmatpush1.bf16.msra.mxu0 0
    %2744 = vmatprep.subr.bf16.mxu0 0
    %2745 = vmatpush1.bf16.msra.mxu0 0
    %2746 = vmatprep.subr.bf16.mxu0 0
    %2747 = vmatpush1.bf16.msra.mxu0 0
    %2748 = vmatprep.subr.bf16.mxu0 0
    %2749 = vmatpush1.bf16.msra.mxu0 0
    %2750 = vmatprep.subr.bf16.mxu0 0
    %2751 = vmatpush1.bf16.msra.mxu0 0
    %2752 = vmatprep.subr.bf16.mxu0 0
    %2753 = vmatpush1.bf16.msra.mxu0 0
    %2754 = vmatprep.subr.bf16.mxu0 0
    %2755 = vmatpush1.bf16.msra.mxu0 0
    %2756 = vmatprep.subr.bf16.mxu0 0
    %2757 = vmatpush1.bf16.msra.mxu0 0
    %2758 = vmatprep.mubr.bf16.mxu0 0
    %2759 = vmatmul.mubr.bf16.gmra.mrb[0].mxu0 %v886
    %v2760 = vpop.f32.mrb[0].mxu0
    %v2761 = vadd.f32 0.0, %v2760
    %v2762 = vpop.f32.mrb[0].mxu0
    %v2763 = vpop.f32.mrb[0].mxu0
    %v2764 = vpop.f32.mrb[0].mxu0
    %2765 = vdwg.mxu0
    %v2766 = vadd.f32 %v2693, %v2761
    %v2767 = vld [vmem:[#allocation23] sm:$0x1]
    %v2769 = vlaneseq
    %v2770 = vshrl.u32 %v2769, 7
    %v2771 = vsub.s32 0, %v2770
    %v2772 = vrot.slane %v2767, %v2771
    %v2774 = vadd.f32 %v2766, %v2772
    %2775 = vst [vmem:[#allocation25] sm:$0xff] %v2774
    // Predicated region
    $region130: #{generator_forward.1} parent=1 // pred_check
      _
    $region131: #{generator_forward.1} parent=1 // pred_check_branch
      %2777 = sbr.rel (0) target = $region133
    $region132: #{generator_forward.1} parent=1 // pred_region
      %s2779 = ssub.s32 128, 128
      %2780 = vsyncadd [#allocation4], %s2779
      %s2782 = sshll.u32 [#allocation25], 4
      %s2783 = int_to_ptr.vmem [resolvable:$true] %s2782
      %2785 = dma.vmem_to_hbm [thread:$0]  %s2783, 128, %s18, [#allocation4]
    $region133: #{generator_forward.1} parent=1 // pred_fallthru
      _
    // Predicated region
    $region134: #{generator_forward.1} parent=1 // pred_check
      _
    $region135: #{generator_forward.1} parent=1 // pred_check_branch
      %2787 = sbr.rel (0) target = $region137
    $region136: #{generator_forward.1} parent=1 // pred_region
      %2788 = dma.done [#allocation4], 128
    $region137: #{generator_forward.1} parent=1 // pred_fallthru
      _
    %2789 = vsyncpa [#allocation3], 1
    %2790 = vsyncpa [#allocation6], 1
    %2791 = vsyncpa [#allocation9], 1
    %2792 = vsyncpa [#allocation12], 1
    %2793 = vsyncpa [#allocation15], 1
    %2794 = vsyncpa [#allocation18], 1
    %2795 = vsyncpa [#allocation21], 1
    %2796 = vsyncpa [#allocation24], 1
    %2797 = vsyncpa [#allocation4], 1

</llo_original>
